<compile_context>
chip_gen: v5e
topology: v5e:2x2
jax: 0.10.0
libtpu: 0.0.40
codegen_flags: <defaults>
</compile_context>

<pallas_src>
import functools

import jax
import jax.numpy as jnp
from jax.experimental import pallas as pl
from jax.experimental.pallas import tpu as pltpu


_BN_EPS = 1e-5


# ----------------------------------------------------------------------------
# Fused Pallas kernel: one bottleneck residual block for one image
# ----------------------------------------------------------------------------

def _fused_resnet_block_kernel(xp_ref, w1_ref, s1_ref, b1_ref,
                               w2_ref, s2_ref, b2_ref,
                               w3_ref, s3_ref, b3_ref,
                               o_ref, *, H, W):
    """c1(1x1)+BN+ReLU -> c2(3x3)+BN+ReLU -> c3(1x1)+BN -> +x -> ReLU, in VMEM.

    xp_ref : (1, H+2, Wq, Cin)  zero-padded NHWC input (1-px halo; Wq = rup(W+2, 8))
    w1_ref : (Cin, Cres)        c1 1x1 weights
    w2_ref : (9*Cres, Cres)     c2 3x3 weights, rows ordered (dy, dx, cin)
    w3_ref : (Cres, Cout)       c3 1x1 weights
    s*/b*  : (1, C)             folded BatchNorm scale / bias
    o_ref  : (1, H, W, Cout)    output tile
    """
    Hp = H + 2
    Wq = xp_ref.shape[2]                 # padded width, multiple of 8
    Cin = xp_ref.shape[-1]
    Cres = w1_ref.shape[-1]
    Cout = w3_ref.shape[-1]

    xp = xp_ref[0]                       # (Hp, Wq, Cin), load once

    # ---- c1: 1x1 conv (+BN+ReLU) computed on the padded grid -----------------
    f1 = jnp.dot(xp.reshape(Hp * Wq, Cin), w1_ref[...],
                 preferred_element_type=jnp.float32)
    f1 = jnp.maximum(f1 * s1_ref[...] + b1_ref[...], 0.0)
    f1 = f1.reshape(Hp, Wq, Cres)

    # Zero the halo ring (and width round-up columns) so c2 sees a properly
    # zero-padded input: at padded positions conv1x1(0)=0 but BN+ReLU would
    # otherwise leave relu(bias) there.
    row = jax.lax.broadcasted_iota(jnp.int32, (Hp, Wq, 1), 0)
    col = jax.lax.broadcasted_iota(jnp.int32, (Hp, Wq, 1), 1)
    interior = (row >= 1) & (row <= H) & (col >= 1) & (col <= W)
    f1 = f1 * interior.astype(jnp.float32)

    # ---- c2: 3x3 conv as a single im2col matmul (K = 9*Cres) -----------------
    # Column taps gathered once (3 sublane slices), row taps are cheap
    # major-axis slices; then one wide-K dot.
    g = jnp.concatenate([f1[:, dx:dx + W, :] for dx in range(3)], axis=-1)   # (Hp, W, 3*Cres)
    patches = jnp.concatenate([g[dy:dy + H] for dy in range(3)], axis=-1)    # (H, W, 9*Cres)
    f2 = jnp.dot(patches.reshape(H * W, 9 * Cres).astype(w2_ref.dtype),
                 w2_ref[...], preferred_element_type=jnp.float32)
    f2 = jnp.maximum(f2 * s2_ref[...] + b2_ref[...], 0.0)                    # (H*W, Cres)

    # ---- c3: 1x1 conv + BN, then SEBlock (identity) + residual add + ReLU ----
    f3 = jnp.dot(f2.astype(w3_ref.dtype), w3_ref[...],
                 preferred_element_type=jnp.float32)
    f3 = f3 * s3_ref[...] + b3_ref[...]
    x_res = xp[1:H + 1, 1:W + 1, :].reshape(H * W, Cin).astype(jnp.float32)
    out = jnp.maximum(f3 + x_res, 0.0)                                       # (H*W, Cout)

    o_ref[0] = out.reshape(H, W, Cout).astype(o_ref.dtype)


# ----------------------------------------------------------------------------
# Wrapper: layout glue + pallas_call
# ----------------------------------------------------------------------------

def _fold_bn(bn):
    gamma, beta, mean, var = bn
    scale = gamma / jnp.sqrt(var + _BN_EPS)
    bias = beta - mean * scale
    return scale.reshape(1, -1), bias.reshape(1, -1)


def resnet_block_forward(x_nchw, params):
    """Forward pass matching ResNetBlock (in_channels == out_channels, first=False)."""
    N, Cin, H, W = x_nchw.shape
    Cres = params["c1_w"].shape[1]
    Cout = params["c3_w"].shape[1]
    assert Cin == Cout, "demo config uses in_channels == out_channels (no projection)"

    # NCHW -> NHWC, add the 1-pixel 3x3 halo, and round the padded width up to
    # a multiple of 8 so all in-kernel reshapes are layout-preserving.
    x = jnp.transpose(x_nchw, (0, 2, 3, 1))
    Wq = ((W + 2 + 7) // 8) * 8
    xp = jnp.pad(x, ((0, 0), (1, 1), (1, Wq - (W + 1)), (0, 0)))

    c1_s, c1_b = _fold_bn(params["c1_bn"])
    c2_s, c2_b = _fold_bn(params["c2_bn"])
    c3_s, c3_b = _fold_bn(params["c3_bn"])
    w1 = params["c1_w"]
    w2f = params["c2_w"].reshape(9 * Cres, Cres)     # (dy, dx, cin) flattened on rows
    w3 = params["c3_w"]

    flops = 2 * N * ((H + 2) * Wq * Cin * Cres
                     + H * W * 9 * Cres * Cres
                     + H * W * Cres * Cout)
    bytes_accessed = 4 * (N * (H + 2) * Wq * Cin + N * H * W * Cout
                          + w1.size + w2f.size + w3.size
                          + 2 * (2 * Cres + Cout))

    kernel = functools.partial(_fused_resnet_block_kernel, H=H, W=W)

    out = pl.pallas_call(
        kernel,
        out_shape=jax.ShapeDtypeStruct((N, H, W, Cout), x.dtype),
        grid=(N,),
        in_specs=[
            pl.BlockSpec((1, H + 2, Wq, Cin), lambda n: (n, 0, 0, 0)),
            pl.BlockSpec((Cin, Cres), lambda n: (0, 0)),
            pl.BlockSpec((1, Cres), lambda n: (0, 0)),
            pl.BlockSpec((1, Cres), lambda n: (0, 0)),
            pl.BlockSpec((9 * Cres, Cres), lambda n: (0, 0)),
            pl.BlockSpec((1, Cres), lambda n: (0, 0)),
            pl.BlockSpec((1, Cres), lambda n: (0, 0)),
            pl.BlockSpec((Cres, Cout), lambda n: (0, 0)),
            pl.BlockSpec((1, Cout), lambda n: (0, 0)),
            pl.BlockSpec((1, Cout), lambda n: (0, 0)),
        ],
        out_specs=pl.BlockSpec((1, H, W, Cout), lambda n: (n, 0, 0, 0)),
        compiler_params=pltpu.CompilerParams(
            dimension_semantics=("parallel",)),
        cost_estimate=pl.CostEstimate(
            flops=flops, transcendentals=0, bytes_accessed=bytes_accessed),
    )(xp, w1, c1_s, c1_b, w2f, c2_s, c2_b, w3, c3_s, c3_b)

    return jnp.transpose(out, (0, 3, 1, 2))          # NHWC -> NCHW


# ----------------------------------------------------------------------------
# Pure-JAX reference (for correctness check)
# ----------------------------------------------------------------------------

def ref_forward(x_nchw, params):
    x = jnp.transpose(x_nchw, (0, 2, 3, 1))

    def conv_bn(h, w_hwio, bn, padding):
        y = jax.lax.conv_general_dilated(
            h, w_hwio, window_strides=(1, 1), padding=padding,
            dimension_numbers=("NHWC", "HWIO", "NHWC"))
        gamma, beta, mean, var = bn
        scale = gamma / jnp.sqrt(var + _BN_EPS)
        return y * scale + (beta - mean * scale)

    c1_w = params["c1_w"].reshape(1, 1, *params["c1_w"].shape)
    c3_w = params["c3_w"].reshape(1, 1, *params["c3_w"].shape)

    f = jax.nn.relu(conv_bn(x, c1_w, params["c1_bn"], "VALID"))
    f = jax.nn.relu(conv_bn(f, params["c2_w"], params["c2_bn"], ((1, 1), (1, 1))))
    f = conv_bn(f, c3_w, params["c3_bn"], "VALID")
    h = jax.nn.relu(f + x)
    return jnp.transpose(h, (0, 3, 1, 2))


# ----------------------------------------------------------------------------
# Deterministic parameter init
# ----------------------------------------------------------------------------

def _init_bn(key, c):
    k1, k2, k3, k4 = jax.random.split(key, 4)
    gamma = 1.0 + 0.1 * jax.random.normal(k1, (c,), jnp.float32)
    beta = 0.1 * jax.random.normal(k2, (c,), jnp.float32)
    mean = 0.1 * jax.random.normal(k3, (c,), jnp.float32)
    var = jax.random.uniform(k4, (c,), jnp.float32, 0.5, 1.5)
    return (gamma, beta, mean, var)


def init_params(key, in_channels, out_channels):
    res_channels = in_channels // 4          # first=False, no projection
    ks = jax.random.split(key, 6)
    return {
        # 1x1 conv weights stored as (Cin, Cout); 3x3 stored as (kh, kw, Cin, Cout)
        "c1_w": 0.1 * jax.random.normal(ks[0], (in_channels, res_channels), jnp.float32),
        "c1_bn": _init_bn(ks[1], res_channels),
        "c2_w": 0.1 * jax.random.normal(ks[2], (3, 3, res_channels, res_channels), jnp.float32),
        "c2_bn": _init_bn(ks[3], res_channels),
        "c3_w": 0.1 * jax.random.normal(ks[4], (res_channels, out_channels), jnp.float32),
        "c3_bn": _init_bn(ks[5], out_channels),
    }


# ----------------------------------------------------------------------------
# Main
# ----------------------------------------------------------------------------

if __name__ == "__main__":
    key = jax.random.PRNGKey(0)
    kp, kx = jax.random.split(key)

    N, C, H, W = 2, 16, 16, 16                # NCHW, in_channels == out_channels
    params = init_params(kp, in_channels=C, out_channels=C)
    x = jax.random.normal(kx, (N, C, H, W), jnp.float32)

    out = jax.block_until_ready(resnet_block_forward(x, params))
    ref = jax.block_until_ready(ref_forward(x, params))

    assert out.shape == (N, C, H, W), out.shape
    max_err = float(jnp.max(jnp.abs(out - ref)))
    assert jnp.allclose(out, ref, atol=2e-4, rtol=2e-4), max_err

    print("KERNEL_OK")
</pallas_src>

<mosaic_0001>
module attributes {stable_mosaic.version = 11 : i64} {
  func.func @_fused_resnet_block_kernel(%arg0: i32, %arg1: memref<1x18x24x16xf32, #tpu.memory_space<vmem>>, %arg2: memref<16x4xf32, #tpu.memory_space<vmem>>, %arg3: memref<1x4xf32, #tpu.memory_space<vmem>>, %arg4: memref<1x4xf32, #tpu.memory_space<vmem>>, %arg5: memref<36x4xf32, #tpu.memory_space<vmem>>, %arg6: memref<1x4xf32, #tpu.memory_space<vmem>>, %arg7: memref<1x4xf32, #tpu.memory_space<vmem>>, %arg8: memref<4x16xf32, #tpu.memory_space<vmem>>, %arg9: memref<1x16xf32, #tpu.memory_space<vmem>>, %arg10: memref<1x16xf32, #tpu.memory_space<vmem>>, %arg11: memref<1x16x16x16xf32, #tpu.memory_space<vmem>>) attributes {dimension_semantics = [#tpu.dimension_semantics<parallel>], iteration_bounds = array<i64: 2>, scalar_prefetch = 0 : i64, scratch_operands = 0 : i64, tpu.core_type = #tpu.core_type<tc>, window_params = [{transform_indices = @transform_0, window_bounds = array<i64: 1, 18, 24, 16>}, {pipeline_mode = #tpu.pipeline_mode<synchronous>, transform_indices = @transform_1, window_bounds = array<i64: 16, 4>}, {pipeline_mode = #tpu.pipeline_mode<synchronous>, transform_indices = @transform_2, window_bounds = array<i64: 1, 4>}, {pipeline_mode = #tpu.pipeline_mode<synchronous>, transform_indices = @transform_3, window_bounds = array<i64: 1, 4>}, {pipeline_mode = #tpu.pipeline_mode<synchronous>, transform_indices = @transform_4, window_bounds = array<i64: 36, 4>}, {pipeline_mode = #tpu.pipeline_mode<synchronous>, transform_indices = @transform_5, window_bounds = array<i64: 1, 4>}, {pipeline_mode = #tpu.pipeline_mode<synchronous>, transform_indices = @transform_6, window_bounds = array<i64: 1, 4>}, {pipeline_mode = #tpu.pipeline_mode<synchronous>, transform_indices = @transform_7, window_bounds = array<i64: 4, 16>}, {pipeline_mode = #tpu.pipeline_mode<synchronous>, transform_indices = @transform_8, window_bounds = array<i64: 1, 16>}, {pipeline_mode = #tpu.pipeline_mode<synchronous>, transform_indices = @transform_9, window_bounds = array<i64: 1, 16>}, {transform_indices = @transform_10, window_bounds = array<i64: 1, 16, 16, 16>}]} {
    %c0 = arith.constant 0 : index
    %c0_0 = arith.constant 0 : index
    %c0_1 = arith.constant 0 : index
    %c0_2 = arith.constant 0 : index
    %0 = vector.load %arg1[%c0, %c0_0, %c0_1, %c0_2] : memref<1x18x24x16xf32, #tpu.memory_space<vmem>>, vector<1x18x24x16xf32>
    %1 = vector.shape_cast %0 : vector<1x18x24x16xf32> to vector<18x24x16xf32>
    %2 = vector.shape_cast %1 : vector<18x24x16xf32> to vector<432x16xf32>
    %c0_3 = arith.constant 0 : index
    %c0_4 = arith.constant 0 : index
    %3 = vector.load %arg2[%c0_3, %c0_4] : memref<16x4xf32, #tpu.memory_space<vmem>>, vector<16x4xf32>
    %cst = arith.constant dense<0.000000e+00> : vector<432x4xf32>
    %4 = tpu.matmul %2, %3, %cst {dimension_numbers = #tpu.dot_dimension_numbers<[1], [0], [0], [1], [0, 0, 1, 1], [], []>} : vector<432x16xf32>, vector<16x4xf32>, vector<432x4xf32> -> vector<432x4xf32>
    %c0_5 = arith.constant 0 : index
    %c0_6 = arith.constant 0 : index
    %5 = vector.load %arg3[%c0_5, %c0_6] : memref<1x4xf32, #tpu.memory_space<vmem>>, vector<1x4xf32>
    %6 = vector.broadcast %5 : vector<1x4xf32> to vector<432x4xf32>
    %7 = arith.mulf %4, %6 : vector<432x4xf32>
    %c0_7 = arith.constant 0 : index
    %c0_8 = arith.constant 0 : index
    %8 = vector.load %arg4[%c0_7, %c0_8] : memref<1x4xf32, #tpu.memory_space<vmem>>, vector<1x4xf32>
    %9 = vector.broadcast %8 : vector<1x4xf32> to vector<432x4xf32>
    %10 = arith.addf %7, %9 : vector<432x4xf32>
    %cst_9 = arith.constant 0.000000e+00 : f32
    %11 = vector.broadcast %cst_9 : f32 to vector<432x4xf32>
    %12 = arith.maximumf %10, %11 : vector<432x4xf32>
    %13 = vector.shape_cast %12 : vector<432x4xf32> to vector<18x24x4xf32>
    %14 = tpu.iota {dimensions = array<i32: 0>} : vector<18x24x1xi32>
    %15 = tpu.iota {dimensions = array<i32: 1>} : vector<18x24x1xi32>
    %c1_i32 = arith.constant 1 : i32
    %16 = vector.broadcast %c1_i32 : i32 to vector<18x24x1xi32>
    %17 = arith.cmpi sge, %14, %16 : vector<18x24x1xi32>
    %c16_i32 = arith.constant 16 : i32
    %18 = vector.broadcast %c16_i32 : i32 to vector<18x24x1xi32>
    %19 = arith.cmpi sle, %14, %18 : vector<18x24x1xi32>
    %20 = arith.andi %17, %19 : vector<18x24x1xi1>
    %c1_i32_10 = arith.constant 1 : i32
    %21 = vector.broadcast %c1_i32_10 : i32 to vector<18x24x1xi32>
    %22 = arith.cmpi sge, %15, %21 : vector<18x24x1xi32>
    %23 = arith.andi %20, %22 : vector<18x24x1xi1>
    %c16_i32_11 = arith.constant 16 : i32
    %24 = vector.broadcast %c16_i32_11 : i32 to vector<18x24x1xi32>
    %25 = arith.cmpi sle, %15, %24 : vector<18x24x1xi32>
    %26 = arith.andi %23, %25 : vector<18x24x1xi1>
    %27 = arith.extui %26 : vector<18x24x1xi1> to vector<18x24x1xi32>
    %28 = arith.sitofp %27 : vector<18x24x1xi32> to vector<18x24x1xf32>
    %29 = vector.broadcast %28 : vector<18x24x1xf32> to vector<18x24x4xf32>
    %30 = arith.mulf %13, %29 : vector<18x24x4xf32>
    %31 = vector.extract_strided_slice %30 {offsets = [0, 0, 0], sizes = [18, 16, 4], strides = [1, 1, 1]} : vector<18x24x4xf32> to vector<18x16x4xf32>
    %32 = vector.extract_strided_slice %30 {offsets = [0, 1, 0], sizes = [18, 16, 4], strides = [1, 1, 1]} : vector<18x24x4xf32> to vector<18x16x4xf32>
    %33 = vector.extract_strided_slice %30 {offsets = [0, 2, 0], sizes = [18, 16, 4], strides = [1, 1, 1]} : vector<18x24x4xf32> to vector<18x16x4xf32>
    %34 = tpu.concatenate %31, %32, %33 in 2 : vector<18x16x4xf32>, vector<18x16x4xf32>, vector<18x16x4xf32> -> vector<18x16x12xf32>
    %35 = vector.extract_strided_slice %34 {offsets = [0, 0, 0], sizes = [16, 16, 12], strides = [1, 1, 1]} : vector<18x16x12xf32> to vector<16x16x12xf32>
    %36 = vector.extract_strided_slice %34 {offsets = [1, 0, 0], sizes = [16, 16, 12], strides = [1, 1, 1]} : vector<18x16x12xf32> to vector<16x16x12xf32>
    %37 = vector.extract_strided_slice %34 {offsets = [2, 0, 0], sizes = [16, 16, 12], strides = [1, 1, 1]} : vector<18x16x12xf32> to vector<16x16x12xf32>
    %38 = tpu.concatenate %35, %36, %37 in 2 : vector<16x16x12xf32>, vector<16x16x12xf32>, vector<16x16x12xf32> -> vector<16x16x36xf32>
    %39 = vector.shape_cast %38 : vector<16x16x36xf32> to vector<256x36xf32>
    %c0_12 = arith.constant 0 : index
    %c0_13 = arith.constant 0 : index
    %40 = vector.load %arg5[%c0_12, %c0_13] : memref<36x4xf32, #tpu.memory_space<vmem>>, vector<36x4xf32>
    %cst_14 = arith.constant dense<0.000000e+00> : vector<256x4xf32>
    %41 = tpu.matmul %39, %40, %cst_14 {dimension_numbers = #tpu.dot_dimension_numbers<[1], [0], [0], [1], [0, 0, 1, 1], [], []>} : vector<256x36xf32>, vector<36x4xf32>, vector<256x4xf32> -> vector<256x4xf32>
    %c0_15 = arith.constant 0 : index
    %c0_16 = arith.constant 0 : index
    %42 = vector.load %arg6[%c0_15, %c0_16] : memref<1x4xf32, #tpu.memory_space<vmem>>, vector<1x4xf32>
    %43 = vector.broadcast %42 : vector<1x4xf32> to vector<256x4xf32>
    %44 = arith.mulf %41, %43 : vector<256x4xf32>
    %c0_17 = arith.constant 0 : index
    %c0_18 = arith.constant 0 : index
    %45 = vector.load %arg7[%c0_17, %c0_18] : memref<1x4xf32, #tpu.memory_space<vmem>>, vector<1x4xf32>
    %46 = vector.broadcast %45 : vector<1x4xf32> to vector<256x4xf32>
    %47 = arith.addf %44, %46 : vector<256x4xf32>
    %cst_19 = arith.constant 0.000000e+00 : f32
    %48 = vector.broadcast %cst_19 : f32 to vector<256x4xf32>
    %49 = arith.maximumf %47, %48 : vector<256x4xf32>
    %c0_20 = arith.constant 0 : index
    %c0_21 = arith.constant 0 : index
    %50 = vector.load %arg8[%c0_20, %c0_21] : memref<4x16xf32, #tpu.memory_space<vmem>>, vector<4x16xf32>
    %cst_22 = arith.constant dense<0.000000e+00> : vector<256x16xf32>
    %51 = tpu.matmul %49, %50, %cst_22 {dimension_numbers = #tpu.dot_dimension_numbers<[1], [0], [0], [1], [0, 0, 1, 1], [], []>} : vector<256x4xf32>, vector<4x16xf32>, vector<256x16xf32> -> vector<256x16xf32>
    %c0_23 = arith.constant 0 : index
    %c0_24 = arith.constant 0 : index
    %52 = vector.load %arg9[%c0_23, %c0_24] : memref<1x16xf32, #tpu.memory_space<vmem>>, vector<1x16xf32>
    %53 = vector.broadcast %52 : vector<1x16xf32> to vector<256x16xf32>
    %54 = arith.mulf %51, %53 : vector<256x16xf32>
    %c0_25 = arith.constant 0 : index
    %c0_26 = arith.constant 0 : index
    %55 = vector.load %arg10[%c0_25, %c0_26] : memref<1x16xf32, #tpu.memory_space<vmem>>, vector<1x16xf32>
    %56 = vector.broadcast %55 : vector<1x16xf32> to vector<256x16xf32>
    %57 = arith.addf %54, %56 : vector<256x16xf32>
    %58 = vector.extract_strided_slice %1 {offsets = [1, 1, 0], sizes = [16, 16, 16], strides = [1, 1, 1]} : vector<18x24x16xf32> to vector<16x16x16xf32>
    %59 = vector.shape_cast %58 : vector<16x16x16xf32> to vector<256x16xf32>
    %60 = arith.addf %57, %59 : vector<256x16xf32>
    %cst_27 = arith.constant 0.000000e+00 : f32
    %61 = vector.broadcast %cst_27 : f32 to vector<256x16xf32>
    %62 = arith.maximumf %60, %61 : vector<256x16xf32>
    %63 = vector.shape_cast %62 : vector<256x16xf32> to vector<16x16x16xf32>
    %c0_28 = arith.constant 0 : index
    %c0_29 = arith.constant 0 : index
    %c0_30 = arith.constant 0 : index
    %c0_31 = arith.constant 0 : index
    %64 = vector.load %arg11[%c0_28, %c0_29, %c0_30, %c0_31] : memref<1x16x16x16xf32, #tpu.memory_space<vmem>>, vector<1x16x16x16xf32>
    %65 = vector.shape_cast %64 : vector<1x16x16x16xf32> to vector<16x16x16xf32>
    %66 = vector.shape_cast %63 : vector<16x16x16xf32> to vector<1x16x16x16xf32>
    tpu.vector_store %arg11[%c0_28, %c0_29, %c0_30, %c0_31], %66 {strides = array<i32>} : memref<1x16x16x16xf32, #tpu.memory_space<vmem>>, vector<1x16x16x16xf32>,
    return
  }
  func.func @transform_0(%arg0: i32) -> (i32, i32, i32, i32) {
    %c0_i32 = arith.constant 0 : i32
    %c0_i32_0 = arith.constant 0 : i32
    %c0_i32_1 = arith.constant 0 : i32
    %c0_i32_2 = arith.constant 0 : i32
    return %arg0, %c0_i32, %c0_i32_0, %c0_i32_1 : i32, i32, i32, i32
  }
  func.func @transform_1(%arg0: i32) -> (i32, i32) {
    %c0_i32 = arith.constant 0 : i32
    %c0_i32_0 = arith.constant 0 : i32
    %c0_i32_1 = arith.constant 0 : i32
    return %c0_i32, %c0_i32_0 : i32, i32
  }
  func.func @transform_2(%arg0: i32) -> (i32, i32) {
    %c0_i32 = arith.constant 0 : i32
    %c0_i32_0 = arith.constant 0 : i32
    %c0_i32_1 = arith.constant 0 : i32
    return %c0_i32, %c0_i32_0 : i32, i32
  }
  func.func @transform_3(%arg0: i32) -> (i32, i32) {
    %c0_i32 = arith.constant 0 : i32
    %c0_i32_0 = arith.constant 0 : i32
    %c0_i32_1 = arith.constant 0 : i32
    return %c0_i32, %c0_i32_0 : i32, i32
  }
  func.func @transform_4(%arg0: i32) -> (i32, i32) {
    %c0_i32 = arith.constant 0 : i32
    %c0_i32_0 = arith.constant 0 : i32
    %c0_i32_1 = arith.constant 0 : i32
    return %c0_i32, %c0_i32_0 : i32, i32
  }
  func.func @transform_5(%arg0: i32) -> (i32, i32) {
    %c0_i32 = arith.constant 0 : i32
    %c0_i32_0 = arith.constant 0 : i32
    %c0_i32_1 = arith.constant 0 : i32
    return %c0_i32, %c0_i32_0 : i32, i32
  }
  func.func @transform_6(%arg0: i32) -> (i32, i32) {
    %c0_i32 = arith.constant 0 : i32
    %c0_i32_0 = arith.constant 0 : i32
    %c0_i32_1 = arith.constant 0 : i32
    return %c0_i32, %c0_i32_0 : i32, i32
  }
  func.func @transform_7(%arg0: i32) -> (i32, i32) {
    %c0_i32 = arith.constant 0 : i32
    %c0_i32_0 = arith.constant 0 : i32
    %c0_i32_1 = arith.constant 0 : i32
    return %c0_i32, %c0_i32_0 : i32, i32
  }
  func.func @transform_8(%arg0: i32) -> (i32, i32) {
    %c0_i32 = arith.constant 0 : i32
    %c0_i32_0 = arith.constant 0 : i32
    %c0_i32_1 = arith.constant 0 : i32
    return %c0_i32, %c0_i32_0 : i32, i32
  }
  func.func @transform_9(%arg0: i32) -> (i32, i32) {
    %c0_i32 = arith.constant 0 : i32
    %c0_i32_0 = arith.constant 0 : i32
    %c0_i32_1 = arith.constant 0 : i32
    return %c0_i32, %c0_i32_0 : i32, i32
  }
  func.func @transform_10(%arg0: i32) -> (i32, i32, i32, i32) {
    %c0_i32 = arith.constant 0 : i32
    %c0_i32_0 = arith.constant 0 : i32
    %c0_i32_1 = arith.constant 0 : i32
    %c0_i32_2 = arith.constant 0 : i32
    return %arg0, %c0_i32, %c0_i32_0, %c0_i32_1 : i32, i32, i32, i32
  }
}

</mosaic_0001>

<llo_original>
// kernel: tpu_custom_call.1
$region0: #{tpu_custom_call.1}
  #allocation0 [shape = 'u32[]', space=smem, size = 0x4, offset = 0x4, fixed_abs, tag = 'smem constant byte address 0x4 - core index']
  #allocation1 [shape = 'u32[72,128]{1,0:T(1,128)}', space=vmem, size = 0x9000, scoped, tag = 'internal scratch']
  %s0 = inlined_call_operand.vmem [shape: f32[2,18,24,16], index: 0, kind: input, shape index: {}]
  %s1 = inlined_call_operand.vmem [shape: f32[16,4], index: 1, kind: input, shape index: {}]
  %s2 = inlined_call_operand.vmem [shape: f32[1,4], index: 2, kind: input, shape index: {}]
  %s3 = inlined_call_operand.vmem [shape: f32[1,4], index: 3, kind: input, shape index: {}]
  %s4 = inlined_call_operand.vmem [shape: f32[36,4], index: 4, kind: input, shape index: {}]
  %s5 = inlined_call_operand.vmem [shape: f32[1,4], index: 5, kind: input, shape index: {}]
  %s6 = inlined_call_operand.vmem [shape: f32[1,4], index: 6, kind: input, shape index: {}]
  %s7 = inlined_call_operand.vmem [shape: f32[4,16], index: 7, kind: input, shape index: {}]
  %s8 = inlined_call_operand.vmem [shape: f32[1,16], index: 8, kind: input, shape index: {}]
  %s9 = inlined_call_operand.vmem [shape: f32[1,16], index: 9, kind: input, shape index: {}]
  %s10 = inlined_call_operand.hbm [shape: f32[2,16,16,16], index: 10, kind: output, shape index: {}]
  %s11 = sld [smem:[#allocation0]]
  $region73: #{tpu_custom_call.1} parent=0
    _
  %s13 = ssub.s32 1, %s11
  %s14 = scalar_select 0, %s13, %s11
  $region1: #{tpu_custom_call.1} parent=0
    #allocation2 [shape = 'u8[262144]{0}', space=vmem, size = 0x40000, scoped, tag = 'output window, operand 0']
    #allocation3 [shape = 's32[2]{0}', space=sflag, size = 0x8, scoped, tag = 'scoped memory for tpu_custom_call.1']
    %15 = vsyncpa [#allocation3], 0
    %s16 = scalar_lea.sflag [#allocation3], 1
    %17 = vsyncpa %s16, 0
    loop: start=0, step=1, limit=4
    $region2: #{tpu_custom_call.1} parent=1 // loop_pre_header
      _
    $region3: #{tpu_custom_call.1} parent=1 // loop_header
      %s19 = sphi 0, %s23
      %p20 = scmp.ge.s32.totalorder %s19, 4
      %s29 = sphi 0, %s31
      %s32 = sphi 0, %s29
      %s33 = sphi 0, %s32
      %s49 = sphi 0, %s33
      %s53 = sphi 0, %s53
      %s55 = sphi 0, %s53
      %s56 = sphi 0, %s55
      %s70 = sphi 0, %s56
      %s74 = sphi 0, %s74
      %s76 = sphi 0, %s74
      %s77 = sphi 0, %s76
      %s91 = sphi 0, %s77
      %s95 = sphi 0, %s95
      %s97 = sphi 0, %s95
      %s98 = sphi 0, %s97
      %s112 = sphi 0, %s98
      %s116 = sphi 0, %s116
      %s118 = sphi 0, %s116
      %s119 = sphi 0, %s118
      %s133 = sphi 0, %s119
      %s137 = sphi 0, %s137
      %s139 = sphi 0, %s137
      %s140 = sphi 0, %s139
      %s154 = sphi 0, %s140
      %s158 = sphi 0, %s158
      %s160 = sphi 0, %s158
      %s161 = sphi 0, %s160
      %s175 = sphi 0, %s161
      %s179 = sphi 0, %s179
      %s181 = sphi 0, %s179
      %s182 = sphi 0, %s181
      %s196 = sphi 0, %s182
      %s200 = sphi 0, %s200
      %s202 = sphi 0, %s200
      %s203 = sphi 0, %s202
      %s217 = sphi 0, %s203
      %s221 = sphi 0, %s221
      %s223 = sphi 0, %s221
      %s224 = sphi 0, %s223
      %s238 = sphi 0, %s224
      %s244 = sphi 0, %s246
      %s247 = sphi 0, %s244
      %s248 = sphi 0, %s247
      %s264 = sphi 0, %s248
    $region4: #{tpu_custom_call.1} parent=1 // loop_header_branch
      %22 = sbr.rel (%p20) target = $region8
    $region5: #{tpu_custom_call.1} parent=1 // loop_body
      %s24 = ssub.s32 %s19, 1
      %s25 = ssub.s32 %s19, 2
      %s26 = sadd.s32 %s19, 1
      %s27 = ssub.s32 %s19, %s26
      %p28 = scmp.eq.s32.totalorder %s27, 0
      %s30 = sadd.s32 %s29, 1
      %s31 = scalar_select %p28, %s29, %s30
      %p34 = pneg %p28
      %p35 = scmp.eq.s32.totalorder %s19, 1
      %p36 = por %p34, %p35
      %p37 = scmp.ne.s32.totalorder %s29, %s32
      %p38 = scmp.eq.s32.totalorder %s19, 0
      %p39 = por %p37, %p38
      %p40 = scmp.ne.s32.totalorder %s29, %s32
      %p41 = scmp.eq.s32.totalorder %s24, 1
      %p42 = por %p40, %p41
      %p43 = scmp.ne.s32.totalorder %s32, %s33
      %p44 = scmp.eq.s32.totalorder %s24, 0
      %p45 = por %p43, %p44
      %p46 = scmp.ne.s32.totalorder %s32, %s33
      %p47 = scmp.eq.s32.totalorder %s25, 1
      %p48 = por %p46, %p47
      %p50 = scmp.ne.s32.totalorder %s33, %s49
      %p51 = scmp.eq.s32.totalorder %s25, 0
      %p52 = por %p50, %p51
      %s54 = sadd.s32 %s53, 1
      %p57 = scmp.eq.s32.totalorder %s19, 1
      %p58 = scmp.ne.s32.totalorder %s53, %s55
      %p59 = scmp.eq.s32.totalorder %s19, 0
      %p60 = por %p58, %p59
      %p61 = scmp.ne.s32.totalorder %s53, %s55
      %p62 = scmp.eq.s32.totalorder %s24, 1
      %p63 = por %p61, %p62
      %p64 = scmp.ne.s32.totalorder %s55, %s56
      %p65 = scmp.eq.s32.totalorder %s24, 0
      %p66 = por %p64, %p65
      %p67 = scmp.ne.s32.totalorder %s55, %s56
      %p68 = scmp.eq.s32.totalorder %s25, 1
      %p69 = por %p67, %p68
      %p71 = scmp.ne.s32.totalorder %s56, %s70
      %p72 = scmp.eq.s32.totalorder %s25, 0
      %p73 = por %p71, %p72
      %s75 = sadd.s32 %s74, 1
      %p78 = scmp.eq.s32.totalorder %s19, 1
      %p79 = scmp.ne.s32.totalorder %s74, %s76
      %p80 = scmp.eq.s32.totalorder %s19, 0
      %p81 = por %p79, %p80
      %p82 = scmp.ne.s32.totalorder %s74, %s76
      %p83 = scmp.eq.s32.totalorder %s24, 1
      %p84 = por %p82, %p83
      %p85 = scmp.ne.s32.totalorder %s76, %s77
      %p86 = scmp.eq.s32.totalorder %s24, 0
      %p87 = por %p85, %p86
      %p88 = scmp.ne.s32.totalorder %s76, %s77
      %p89 = scmp.eq.s32.totalorder %s25, 1
      %p90 = por %p88, %p89
      %p92 = scmp.ne.s32.totalorder %s77, %s91
      %p93 = scmp.eq.s32.totalorder %s25, 0
      %p94 = por %p92, %p93
      %s96 = sadd.s32 %s95, 1
      %p99 = scmp.eq.s32.totalorder %s19, 1
      %p100 = scmp.ne.s32.totalorder %s95, %s97
      %p101 = scmp.eq.s32.totalorder %s19, 0
      %p102 = por %p100, %p101
      %p103 = scmp.ne.s32.totalorder %s95, %s97
      %p104 = scmp.eq.s32.totalorder %s24, 1
      %p105 = por %p103, %p104
      %p106 = scmp.ne.s32.totalorder %s97, %s98
      %p107 = scmp.eq.s32.totalorder %s24, 0
      %p108 = por %p106, %p107
      %p109 = scmp.ne.s32.totalorder %s97, %s98
      %p110 = scmp.eq.s32.totalorder %s25, 1
      %p111 = por %p109, %p110
      %p113 = scmp.ne.s32.totalorder %s98, %s112
      %p114 = scmp.eq.s32.totalorder %s25, 0
      %p115 = por %p113, %p114
      %s117 = sadd.s32 %s116, 1
      %p120 = scmp.eq.s32.totalorder %s19, 1
      %p121 = scmp.ne.s32.totalorder %s116, %s118
      %p122 = scmp.eq.s32.totalorder %s19, 0
      %p123 = por %p121, %p122
      %p124 = scmp.ne.s32.totalorder %s116, %s118
      %p125 = scmp.eq.s32.totalorder %s24, 1
      %p126 = por %p124, %p125
      %p127 = scmp.ne.s32.totalorder %s118, %s119
      %p128 = scmp.eq.s32.totalorder %s24, 0
      %p129 = por %p127, %p128
      %p130 = scmp.ne.s32.totalorder %s118, %s119
      %p131 = scmp.eq.s32.totalorder %s25, 1
      %p132 = por %p130, %p131
      %p134 = scmp.ne.s32.totalorder %s119, %s133
      %p135 = scmp.eq.s32.totalorder %s25, 0
      %p136 = por %p134, %p135
      %s138 = sadd.s32 %s137, 1
      %p141 = scmp.eq.s32.totalorder %s19, 1
      %p142 = scmp.ne.s32.totalorder %s137, %s139
      %p143 = scmp.eq.s32.totalorder %s19, 0
      %p144 = por %p142, %p143
      %p145 = scmp.ne.s32.totalorder %s137, %s139
      %p146 = scmp.eq.s32.totalorder %s24, 1
      %p147 = por %p145, %p146
      %p148 = scmp.ne.s32.totalorder %s139, %s140
      %p149 = scmp.eq.s32.totalorder %s24, 0
      %p150 = por %p148, %p149
      %p151 = scmp.ne.s32.totalorder %s139, %s140
      %p152 = scmp.eq.s32.totalorder %s25, 1
      %p153 = por %p151, %p152
      %p155 = scmp.ne.s32.totalorder %s140, %s154
      %p156 = scmp.eq.s32.totalorder %s25, 0
      %p157 = por %p155, %p156
      %s159 = sadd.s32 %s158, 1
      %p162 = scmp.eq.s32.totalorder %s19, 1
      %p163 = scmp.ne.s32.totalorder %s158, %s160
      %p164 = scmp.eq.s32.totalorder %s19, 0
      %p165 = por %p163, %p164
      %p166 = scmp.ne.s32.totalorder %s158, %s160
      %p167 = scmp.eq.s32.totalorder %s24, 1
      %p168 = por %p166, %p167
      %p169 = scmp.ne.s32.totalorder %s160, %s161
      %p170 = scmp.eq.s32.totalorder %s24, 0
      %p171 = por %p169, %p170
      %p172 = scmp.ne.s32.totalorder %s160, %s161
      %p173 = scmp.eq.s32.totalorder %s25, 1
      %p174 = por %p172, %p173
      %p176 = scmp.ne.s32.totalorder %s161, %s175
      %p177 = scmp.eq.s32.totalorder %s25, 0
      %p178 = por %p176, %p177
      %s180 = sadd.s32 %s179, 1
      %p183 = scmp.eq.s32.totalorder %s19, 1
      %p184 = scmp.ne.s32.totalorder %s179, %s181
      %p185 = scmp.eq.s32.totalorder %s19, 0
      %p186 = por %p184, %p185
      %p187 = scmp.ne.s32.totalorder %s179, %s181
      %p188 = scmp.eq.s32.totalorder %s24, 1
      %p189 = por %p187, %p188
      %p190 = scmp.ne.s32.totalorder %s181, %s182
      %p191 = scmp.eq.s32.totalorder %s24, 0
      %p192 = por %p190, %p191
      %p193 = scmp.ne.s32.totalorder %s181, %s182
      %p194 = scmp.eq.s32.totalorder %s25, 1
      %p195 = por %p193, %p194
      %p197 = scmp.ne.s32.totalorder %s182, %s196
      %p198 = scmp.eq.s32.totalorder %s25, 0
      %p199 = por %p197, %p198
      %s201 = sadd.s32 %s200, 1
      %p204 = scmp.eq.s32.totalorder %s19, 1
      %p205 = scmp.ne.s32.totalorder %s200, %s202
      %p206 = scmp.eq.s32.totalorder %s19, 0
      %p207 = por %p205, %p206
      %p208 = scmp.ne.s32.totalorder %s200, %s202
      %p209 = scmp.eq.s32.totalorder %s24, 1
      %p210 = por %p208, %p209
      %p211 = scmp.ne.s32.totalorder %s202, %s203
      %p212 = scmp.eq.s32.totalorder %s24, 0
      %p213 = por %p211, %p212
      %p214 = scmp.ne.s32.totalorder %s202, %s203
      %p215 = scmp.eq.s32.totalorder %s25, 1
      %p216 = por %p214, %p215
      %p218 = scmp.ne.s32.totalorder %s203, %s217
      %p219 = scmp.eq.s32.totalorder %s25, 0
      %p220 = por %p218, %p219
      %s222 = sadd.s32 %s221, 1
      %p225 = scmp.eq.s32.totalorder %s19, 1
      %p226 = scmp.ne.s32.totalorder %s221, %s223
      %p227 = scmp.eq.s32.totalorder %s19, 0
      %p228 = por %p226, %p227
      %p229 = scmp.ne.s32.totalorder %s221, %s223
      %p230 = scmp.eq.s32.totalorder %s24, 1
      %p231 = por %p229, %p230
      %p232 = scmp.ne.s32.totalorder %s223, %s224
      %p233 = scmp.eq.s32.totalorder %s24, 0
      %p234 = por %p232, %p233
      %p235 = scmp.ne.s32.totalorder %s223, %s224
      %p236 = scmp.eq.s32.totalorder %s25, 1
      %p237 = por %p235, %p236
      %p239 = scmp.ne.s32.totalorder %s224, %s238
      %p240 = scmp.eq.s32.totalorder %s25, 0
      %p241 = por %p239, %p240
      %s242 = ssub.s32 %s19, %s26
      %p243 = scmp.eq.s32.totalorder %s242, 0
      %s245 = sadd.s32 %s244, 1
      %s246 = scalar_select %p243, %s244, %s245
      %p249 = pneg %p243
      %p250 = scmp.eq.s32.totalorder %s19, 1
      %p251 = por %p249, %p250
      %p252 = scmp.ne.s32.totalorder %s244, %s247
      %p253 = scmp.eq.s32.totalorder %s19, 0
      %p254 = por %p252, %p253
      %p255 = scmp.ne.s32.totalorder %s244, %s247
      %p256 = scmp.eq.s32.totalorder %s24, 1
      %p257 = por %p255, %p256
      %p258 = scmp.ne.s32.totalorder %s247, %s248
      %p259 = scmp.eq.s32.totalorder %s24, 0
      %p260 = por %p258, %p259
      %p261 = scmp.ne.s32.totalorder %s247, %s248
      %p262 = scmp.eq.s32.totalorder %s25, 1
      %p263 = por %p261, %p262
      %p265 = scmp.ne.s32.totalorder %s248, %s264
      %p266 = scmp.eq.s32.totalorder %s25, 0
      %p267 = por %p265, %p266
      %p268 = scmp.le.s32.totalorder 1, %s19
      %p269 = scmp.lt.s32.totalorder %s19, 3
      %p270 = pnand %p268, %p269
      %p271 = pneg %p270
      // Predicated region
      $region9: #{tpu_custom_call.1} parent=5 // pred_check
        _
      $region10: #{tpu_custom_call.1} parent=5 // pred_check_branch
        %273 = sbr.rel (%p270) target = $region12
      $region11: #{tpu_custom_call.1} parent=5 // pred_region
        %s274 = ssub.s32 %s19, 1
        // Predicated region
        $region13: #{tpu_custom_call.1} parent=11 // pred_check
          %p275 = pneg %p66
        $region14: #{tpu_custom_call.1} parent=11 // pred_check_branch
          %277 = sbr.rel (%p275) target = $region16
        $region15: #{tpu_custom_call.1} parent=11 // pred_region
          _
        $region16: #{tpu_custom_call.1} parent=11 // pred_fallthru
          _
        // Predicated region
        $region17: #{tpu_custom_call.1} parent=11 // pred_check
          %p278 = pneg %p87
        $region18: #{tpu_custom_call.1} parent=11 // pred_check_branch
          %280 = sbr.rel (%p278) target = $region20
        $region19: #{tpu_custom_call.1} parent=11 // pred_region
          _
        $region20: #{tpu_custom_call.1} parent=11 // pred_fallthru
          _
        // Predicated region
        $region21: #{tpu_custom_call.1} parent=11 // pred_check
          %p281 = pneg %p108
        $region22: #{tpu_custom_call.1} parent=11 // pred_check_branch
          %283 = sbr.rel (%p281) target = $region24
        $region23: #{tpu_custom_call.1} parent=11 // pred_region
          _
        $region24: #{tpu_custom_call.1} parent=11 // pred_fallthru
          _
        // Predicated region
        $region25: #{tpu_custom_call.1} parent=11 // pred_check
          %p284 = pneg %p129
        $region26: #{tpu_custom_call.1} parent=11 // pred_check_branch
          %286 = sbr.rel (%p284) target = $region28
        $region27: #{tpu_custom_call.1} parent=11 // pred_region
          _
        $region28: #{tpu_custom_call.1} parent=11 // pred_fallthru
          _
        // Predicated region
        $region29: #{tpu_custom_call.1} parent=11 // pred_check
          %p287 = pneg %p150
        $region30: #{tpu_custom_call.1} parent=11 // pred_check_branch
          %289 = sbr.rel (%p287) target = $region32
        $region31: #{tpu_custom_call.1} parent=11 // pred_region
          _
        $region32: #{tpu_custom_call.1} parent=11 // pred_fallthru
          _
        // Predicated region
        $region33: #{tpu_custom_call.1} parent=11 // pred_check
          %p290 = pneg %p171
        $region34: #{tpu_custom_call.1} parent=11 // pred_check_branch
          %292 = sbr.rel (%p290) target = $region36
        $region35: #{tpu_custom_call.1} parent=11 // pred_region
          _
        $region36: #{tpu_custom_call.1} parent=11 // pred_fallthru
          _
        // Predicated region
        $region37: #{tpu_custom_call.1} parent=11 // pred_check
          %p293 = pneg %p192
        $region38: #{tpu_custom_call.1} parent=11 // pred_check_branch
          %295 = sbr.rel (%p293) target = $region40
        $region39: #{tpu_custom_call.1} parent=11 // pred_region
          _
        $region40: #{tpu_custom_call.1} parent=11 // pred_fallthru
          _
        // Predicated region
        $region41: #{tpu_custom_call.1} parent=11 // pred_check
          %p296 = pneg %p213
        $region42: #{tpu_custom_call.1} parent=11 // pred_check_branch
          %298 = sbr.rel (%p296) target = $region44
        $region43: #{tpu_custom_call.1} parent=11 // pred_region
          _
        $region44: #{tpu_custom_call.1} parent=11 // pred_fallthru
          _
        // Predicated region
        $region45: #{tpu_custom_call.1} parent=11 // pred_check
          %p299 = pneg %p234
        $region46: #{tpu_custom_call.1} parent=11 // pred_check_branch
          %301 = sbr.rel (%p299) target = $region48
        $region47: #{tpu_custom_call.1} parent=11 // pred_region
          _
        $region48: #{tpu_custom_call.1} parent=11 // pred_fallthru
          _
      $region12: #{tpu_custom_call.1} parent=5 // pred_fallthru
        _
      %p302 = scmp.lt.s32.totalorder %s19, 2
      // Predicated region
      $region49: #{tpu_custom_call.1} parent=5 // pred_check
        %p303 = pneg %p302
      $region50: #{tpu_custom_call.1} parent=5 // pred_check_branch
        %305 = sbr.rel (%p303) target = $region52
      $region51: #{tpu_custom_call.1} parent=5 // pred_region
        // Predicated region
        $region53: #{tpu_custom_call.1} parent=51 // pred_check
          %p306 = pneg %p39
        $region54: #{tpu_custom_call.1} parent=51 // pred_check_branch
          %308 = sbr.rel (%p306) target = $region56
        $region55: #{tpu_custom_call.1} parent=51 // pred_region
          %p309 = scmp.lt.s32.totalorder %s19, 1
          %s310 = scalar_select %p309, %s19, 1
          %s311 = smul.addr %s310, 54
          %s312 = smul.addr %s311, 8
          %s313 = scalar_lea.vmem %s0, %s312
        $region56: #{tpu_custom_call.1} parent=51 // pred_fallthru
          _
      $region52: #{tpu_custom_call.1} parent=5 // pred_fallthru
        _
      %p314 = scmp.le.s32.totalorder 1, %s19
      %p315 = scmp.lt.s32.totalorder %s19, 3
      %p316 = pnand %p314, %p315
      %p317 = pneg %p316
      // Predicated region
      $region57: #{tpu_custom_call.1} parent=5 // pred_check
        _
      $region58: #{tpu_custom_call.1} parent=5 // pred_check_branch
        %319 = sbr.rel (%p316) target = $region60
      $region59: #{tpu_custom_call.1} parent=5 // pred_region
        %s320 = ssub.s32 %s19, 1
        %p321 = scmp.lt.s32.totalorder %s24, 1
        %s322 = scalar_select %p321, %s24, 1
        %s323 = smul.addr %s322, 54
        %s324 = smul.addr %s323, 8
        %s325 = scalar_lea.vmem %s0, %s324
        %p326 = pneg %p45
        %p327 = pneg %p42
        %p328 = pneg %p66
        %p329 = pneg %p63
        %p330 = pneg %p87
        %p331 = pneg %p84
        %p332 = pneg %p108
        %p333 = pneg %p105
        %p334 = pneg %p129
        %p335 = pneg %p126
        %p336 = pneg %p150
        %p337 = pneg %p147
        %p338 = pneg %p171
        %p339 = pneg %p168
        %p340 = pneg %p192
        %p341 = pneg %p189
        %p342 = pneg %p213
        %p343 = pneg %p210
        %p344 = pneg %p234
        %p345 = pneg %p231
        %p346 = pneg %p260
        %p347 = pneg %p257
        %s348 = sand.u32 %s247, 1
        %s349 = scalar_lea.sflag [#allocation3], %s348
        %s350 = sand.u32 %s247, 1
        %s351 = smul.addr %s350, 256
        %s352 = scalar_lea.vmem [#allocation2], %s351
        %p353 = scmp.lt.s32.totalorder %s24, 1
        %s354 = scalar_select %p353, %s24, 1
        %s355 = smul.addr %s354, 54
        %s356 = smul.addr %s355, 8
        %s357 = scalar_lea.vmem %s0, %s356
        %v358 = vld [vmem:[%s357] sm:$0xff]
        %v359 = vld [vmem:[%s357 + $0x8] sm:$0xff]
        %v360 = vld [vmem:[%s357 + $0x10] sm:$0xff]
        %v361 = vld [vmem:[%s357 + $0x18] sm:$0xff]
        %v362 = vld [vmem:[%s357 + $0x20] sm:$0xff]
        %v363 = vld [vmem:[%s357 + $0x28] sm:$0xff]
        %v364 = vld [vmem:[%s357 + $0x30] sm:$0xff]
        %v365 = vld [vmem:[%s357 + $0x38] sm:$0xff]
        %v366 = vld [vmem:[%s357 + $0x40] sm:$0xff]
        %v367 = vld [vmem:[%s357 + $0x48] sm:$0xff]
        %v368 = vld [vmem:[%s357 + $0x50] sm:$0xff]
        %v369 = vld [vmem:[%s357 + $0x58] sm:$0xff]
        %v370 = vld [vmem:[%s357 + $0x60] sm:$0xff]
        %v371 = vld [vmem:[%s357 + $0x68] sm:$0xff]
        %v372 = vld [vmem:[%s357 + $0x70] sm:$0xff]
        %v373 = vld [vmem:[%s357 + $0x78] sm:$0xff]
        %v374 = vld [vmem:[%s357 + $0x80] sm:$0xff]
        %v375 = vld [vmem:[%s357 + $0x88] sm:$0xff]
        %v376 = vld [vmem:[%s357 + $0x90] sm:$0xff]
        %v377 = vld [vmem:[%s357 + $0x98] sm:$0xff]
        %v378 = vld [vmem:[%s357 + $0xa0] sm:$0xff]
        %v379 = vld [vmem:[%s357 + $0xa8] sm:$0xff]
        %v380 = vld [vmem:[%s357 + $0xb0] sm:$0xff]
        %v381 = vld [vmem:[%s357 + $0xb8] sm:$0xff]
        %v382 = vld [vmem:[%s357 + $0xc0] sm:$0xff]
        %v383 = vld [vmem:[%s357 + $0xc8] sm:$0xff]
        %v384 = vld [vmem:[%s357 + $0xd0] sm:$0xff]
        %v385 = vld [vmem:[%s357 + $0xd8] sm:$0xff]
        %v386 = vld [vmem:[%s357 + $0xe0] sm:$0xff]
        %v387 = vld [vmem:[%s357 + $0xe8] sm:$0xff]
        %v388 = vld [vmem:[%s357 + $0xf0] sm:$0xff]
        %v389 = vld [vmem:[%s357 + $0xf8] sm:$0xff]
        %v390 = vld [vmem:[%s357 + $0x100] sm:$0xff]
        %v391 = vld [vmem:[%s357 + $0x108] sm:$0xff]
        %v392 = vld [vmem:[%s357 + $0x110] sm:$0xff]
        %v393 = vld [vmem:[%s357 + $0x118] sm:$0xff]
        %v394 = vld [vmem:[%s357 + $0x120] sm:$0xff]
        %v395 = vld [vmem:[%s357 + $0x128] sm:$0xff]
        %v396 = vld [vmem:[%s357 + $0x130] sm:$0xff]
        %v397 = vld [vmem:[%s357 + $0x138] sm:$0xff]
        %v398 = vld [vmem:[%s357 + $0x140] sm:$0xff]
        %v399 = vld [vmem:[%s357 + $0x148] sm:$0xff]
        %v400 = vld [vmem:[%s357 + $0x150] sm:$0xff]
        %v401 = vld [vmem:[%s357 + $0x158] sm:$0xff]
        %v402 = vld [vmem:[%s357 + $0x160] sm:$0xff]
        %v403 = vld [vmem:[%s357 + $0x168] sm:$0xff]
        %v404 = vld [vmem:[%s357 + $0x170] sm:$0xff]
        %v405 = vld [vmem:[%s357 + $0x178] sm:$0xff]
        %v406 = vld [vmem:[%s357 + $0x180] sm:$0xff]
        %v407 = vld [vmem:[%s357 + $0x188] sm:$0xff]
        %v408 = vld [vmem:[%s357 + $0x190] sm:$0xff]
        %v409 = vld [vmem:[%s357 + $0x198] sm:$0xff]
        %v410 = vld [vmem:[%s357 + $0x1a0] sm:$0xff]
        %v411 = vld [vmem:[%s357 + $0x1a8] sm:$0xff]
        %v412 = vld [vmem:[%s1] sm:$0xff]
        %v413 = vld [vmem:[%s1 + $0x8] sm:$0xff]
        %vm414 = vcmask 130048
        %v416 = vsel %vm414, %v358, 0
        %v419 = vsel %vm414, %v359, 0
        %v422 = vsel %vm414, %v360, 0
        %v425 = vsel %vm414, %v361, 0
        %v428 = vsel %vm414, %v362, 0
        %v431 = vsel %vm414, %v363, 0
        %v434 = vsel %vm414, %v364, 0
        %v437 = vsel %vm414, %v365, 0
        %v440 = vsel %vm414, %v366, 0
        %v443 = vsel %vm414, %v367, 0
        %v446 = vsel %vm414, %v368, 0
        %v449 = vsel %vm414, %v369, 0
        %v452 = vsel %vm414, %v370, 0
        %v455 = vsel %vm414, %v371, 0
        %v458 = vsel %vm414, %v372, 0
        %v461 = vsel %vm414, %v373, 0
        %v464 = vsel %vm414, %v374, 0
        %v467 = vsel %vm414, %v375, 0
        %v470 = vsel %vm414, %v376, 0
        %v473 = vsel %vm414, %v377, 0
        %v476 = vsel %vm414, %v378, 0
        %v479 = vsel %vm414, %v379, 0
        %v482 = vsel %vm414, %v380, 0
        %v485 = vsel %vm414, %v381, 0
        %v488 = vsel %vm414, %v382, 0
        %v491 = vsel %vm414, %v383, 0
        %v494 = vsel %vm414, %v384, 0
        %v497 = vsel %vm414, %v385, 0
        %v500 = vsel %vm414, %v386, 0
        %v503 = vsel %vm414, %v387, 0
        %v506 = vsel %vm414, %v388, 0
        %v509 = vsel %vm414, %v389, 0
        %v512 = vsel %vm414, %v390, 0
        %v515 = vsel %vm414, %v391, 0
        %v518 = vsel %vm414, %v392, 0
        %v521 = vsel %vm414, %v393, 0
        %v524 = vsel %vm414, %v394, 0
        %v527 = vsel %vm414, %v395, 0
        %v530 = vsel %vm414, %v396, 0
        %v533 = vsel %vm414, %v397, 0
        %v536 = vsel %vm414, %v398, 0
        %v539 = vsel %vm414, %v399, 0
        %v542 = vsel %vm414, %v400, 0
        %v545 = vsel %vm414, %v401, 0
        %v548 = vsel %vm414, %v402, 0
        %v551 = vsel %vm414, %v403, 0
        %v554 = vsel %vm414, %v404, 0
        %v557 = vsel %vm414, %v405, 0
        %v560 = vsel %vm414, %v406, 0
        %v563 = vsel %vm414, %v407, 0
        %v566 = vsel %vm414, %v408, 0
        %v569 = vsel %vm414, %v409, 0
        %v572 = vsel %vm414, %v410, 0
        %v575 = vsel %vm414, %v411, 0
        %577 = vmatpush.msra.mxu0 0.0
        %578 = vmatpush.msra.mxu0 0.0
        %579 = vmatpush.msra.mxu0 0.0
        %580 = vmatpush.msra.mxu0 0.0
        %581 = vmatpush.msra.mxu0 0.0
        %582 = vmatpush.msra.mxu0 0.0
        %583 = vmatpush.msra.mxu0 0.0
        %584 = vmatpush.msra.mxu0 0.0
        %585 = vmatpush.msra.mxu0 0.0
        %586 = vmatpush.msra.mxu0 0.0
        %587 = vmatpush.msra.mxu0 0.0
        %588 = vmatpush.msra.mxu0 0.0
        %589 = vmatpush.msra.mxu0 0.0
        %590 = vmatpush.msra.mxu0 0.0
        %591 = vmatpush.msra.mxu0 %v413
        %592 = vmatpush.msra.mxu0 %v412
        %593 = vmatmul.f32.gmra.mxu0 %v416
        %v594 = vpop.f32.mrf.mxu0
        %v595 = vadd.f32 0.0, %v594
        %596 = vmatmul.f32.gmra.mxu0 %v419
        %v597 = vpop.f32.mrf.mxu0
        %v598 = vadd.f32 0.0, %v597
        %599 = vmatmul.f32.gmra.mxu0 %v422
        %v600 = vpop.f32.mrf.mxu0
        %v601 = vadd.f32 0.0, %v600
        %602 = vmatmul.f32.gmra.mxu0 %v425
        %v603 = vpop.f32.mrf.mxu0
        %v604 = vadd.f32 0.0, %v603
        %605 = vmatmul.f32.gmra.mxu0 %v428
        %v606 = vpop.f32.mrf.mxu0
        %v607 = vadd.f32 0.0, %v606
        %608 = vmatmul.f32.gmra.mxu0 %v431
        %v609 = vpop.f32.mrf.mxu0
        %v610 = vadd.f32 0.0, %v609
        %611 = vmatmul.f32.gmra.mxu0 %v434
        %v612 = vpop.f32.mrf.mxu0
        %v613 = vadd.f32 0.0, %v612
        %614 = vmatmul.f32.gmra.mxu0 %v437
        %v615 = vpop.f32.mrf.mxu0
        %v616 = vadd.f32 0.0, %v615
        %617 = vmatmul.f32.gmra.mxu0 %v440
        %v618 = vpop.f32.mrf.mxu0
        %v619 = vadd.f32 0.0, %v618
        %620 = vmatmul.f32.gmra.mxu0 %v443
        %v621 = vpop.f32.mrf.mxu0
        %v622 = vadd.f32 0.0, %v621
        %623 = vmatmul.f32.gmra.mxu0 %v446
        %v624 = vpop.f32.mrf.mxu0
        %v625 = vadd.f32 0.0, %v624
        %626 = vmatmul.f32.gmra.mxu0 %v449
        %v627 = vpop.f32.mrf.mxu0
        %v628 = vadd.f32 0.0, %v627
        %629 = vmatmul.f32.gmra.mxu0 %v452
        %v630 = vpop.f32.mrf.mxu0
        %v631 = vadd.f32 0.0, %v630
        %632 = vmatmul.f32.gmra.mxu0 %v455
        %v633 = vpop.f32.mrf.mxu0
        %v634 = vadd.f32 0.0, %v633
        %635 = vmatmul.f32.gmra.mxu0 %v458
        %v636 = vpop.f32.mrf.mxu0
        %v637 = vadd.f32 0.0, %v636
        %638 = vmatmul.f32.gmra.mxu0 %v461
        %v639 = vpop.f32.mrf.mxu0
        %v640 = vadd.f32 0.0, %v639
        %641 = vmatmul.f32.gmra.mxu0 %v464
        %v642 = vpop.f32.mrf.mxu0
        %v643 = vadd.f32 0.0, %v642
        %644 = vmatmul.f32.gmra.mxu0 %v467
        %v645 = vpop.f32.mrf.mxu0
        %v646 = vadd.f32 0.0, %v645
        %647 = vmatmul.f32.gmra.mxu0 %v470
        %v648 = vpop.f32.mrf.mxu0
        %v649 = vadd.f32 0.0, %v648
        %650 = vmatmul.f32.gmra.mxu0 %v473
        %v651 = vpop.f32.mrf.mxu0
        %v652 = vadd.f32 0.0, %v651
        %653 = vmatmul.f32.gmra.mxu0 %v476
        %v654 = vpop.f32.mrf.mxu0
        %v655 = vadd.f32 0.0, %v654
        %656 = vmatmul.f32.gmra.mxu0 %v479
        %v657 = vpop.f32.mrf.mxu0
        %v658 = vadd.f32 0.0, %v657
        %659 = vmatmul.f32.gmra.mxu0 %v482
        %v660 = vpop.f32.mrf.mxu0
        %v661 = vadd.f32 0.0, %v660
        %662 = vmatmul.f32.gmra.mxu0 %v485
        %v663 = vpop.f32.mrf.mxu0
        %v664 = vadd.f32 0.0, %v663
        %665 = vmatmul.f32.gmra.mxu0 %v488
        %v666 = vpop.f32.mrf.mxu0
        %v667 = vadd.f32 0.0, %v666
        %668 = vmatmul.f32.gmra.mxu0 %v491
        %v669 = vpop.f32.mrf.mxu0
        %v670 = vadd.f32 0.0, %v669
        %671 = vmatmul.f32.gmra.mxu0 %v494
        %v672 = vpop.f32.mrf.mxu0
        %v673 = vadd.f32 0.0, %v672
        %674 = vmatmul.f32.gmra.mxu0 %v497
        %v675 = vpop.f32.mrf.mxu0
        %v676 = vadd.f32 0.0, %v675
        %677 = vmatmul.f32.gmra.mxu0 %v500
        %v678 = vpop.f32.mrf.mxu0
        %v679 = vadd.f32 0.0, %v678
        %680 = vmatmul.f32.gmra.mxu0 %v503
        %v681 = vpop.f32.mrf.mxu0
        %v682 = vadd.f32 0.0, %v681
        %683 = vmatmul.f32.gmra.mxu0 %v506
        %v684 = vpop.f32.mrf.mxu0
        %v685 = vadd.f32 0.0, %v684
        %686 = vmatmul.f32.gmra.mxu0 %v509
        %v687 = vpop.f32.mrf.mxu0
        %v688 = vadd.f32 0.0, %v687
        %689 = vmatmul.f32.gmra.mxu0 %v512
        %v690 = vpop.f32.mrf.mxu0
        %v691 = vadd.f32 0.0, %v690
        %692 = vmatmul.f32.gmra.mxu0 %v515
        %v693 = vpop.f32.mrf.mxu0
        %v694 = vadd.f32 0.0, %v693
        %695 = vmatmul.f32.gmra.mxu0 %v518
        %v696 = vpop.f32.mrf.mxu0
        %v697 = vadd.f32 0.0, %v696
        %698 = vmatmul.f32.gmra.mxu0 %v521
        %v699 = vpop.f32.mrf.mxu0
        %v700 = vadd.f32 0.0, %v699
        %701 = vmatmul.f32.gmra.mxu0 %v524
        %v702 = vpop.f32.mrf.mxu0
        %v703 = vadd.f32 0.0, %v702
        %704 = vmatmul.f32.gmra.mxu0 %v527
        %v705 = vpop.f32.mrf.mxu0
        %v706 = vadd.f32 0.0, %v705
        %707 = vmatmul.f32.gmra.mxu0 %v530
        %v708 = vpop.f32.mrf.mxu0
        %v709 = vadd.f32 0.0, %v708
        %710 = vmatmul.f32.gmra.mxu0 %v533
        %v711 = vpop.f32.mrf.mxu0
        %v712 = vadd.f32 0.0, %v711
        %713 = vmatmul.f32.gmra.mxu0 %v536
        %v714 = vpop.f32.mrf.mxu0
        %v715 = vadd.f32 0.0, %v714
        %716 = vmatmul.f32.gmra.mxu0 %v539
        %v717 = vpop.f32.mrf.mxu0
        %v718 = vadd.f32 0.0, %v717
        %719 = vmatmul.f32.gmra.mxu0 %v542
        %v720 = vpop.f32.mrf.mxu0
        %v721 = vadd.f32 0.0, %v720
        %722 = vmatmul.f32.gmra.mxu0 %v545
        %v723 = vpop.f32.mrf.mxu0
        %v724 = vadd.f32 0.0, %v723
        %725 = vmatmul.f32.gmra.mxu0 %v548
        %v726 = vpop.f32.mrf.mxu0
        %v727 = vadd.f32 0.0, %v726
        %728 = vmatmul.f32.gmra.mxu0 %v551
        %v729 = vpop.f32.mrf.mxu0
        %v730 = vadd.f32 0.0, %v729
        %731 = vmatmul.f32.gmra.mxu0 %v554
        %v732 = vpop.f32.mrf.mxu0
        %v733 = vadd.f32 0.0, %v732
        %734 = vmatmul.f32.gmra.mxu0 %v557
        %v735 = vpop.f32.mrf.mxu0
        %v736 = vadd.f32 0.0, %v735
        %737 = vmatmul.f32.gmra.mxu0 %v560
        %v738 = vpop.f32.mrf.mxu0
        %v739 = vadd.f32 0.0, %v738
        %740 = vmatmul.f32.gmra.mxu0 %v563
        %v741 = vpop.f32.mrf.mxu0
        %v742 = vadd.f32 0.0, %v741
        %743 = vmatmul.f32.gmra.mxu0 %v566
        %v744 = vpop.f32.mrf.mxu0
        %v745 = vadd.f32 0.0, %v744
        %746 = vmatmul.f32.gmra.mxu0 %v569
        %v747 = vpop.f32.mrf.mxu0
        %v748 = vadd.f32 0.0, %v747
        %749 = vmatmul.f32.gmra.mxu0 %v572
        %v750 = vpop.f32.mrf.mxu0
        %v751 = vadd.f32 0.0, %v750
        %752 = vmatmul.f32.gmra.mxu0 %v575
        %v753 = vpop.f32.mrf.mxu0
        %v754 = vadd.f32 0.0, %v753
        %755 = vdwg.mxu0
        %v756 = vld [vmem:[%s2] sm:$0x1]
        %v758 = vperm.slane %v756, 0
        %v760 = vmul.f32 %v595, %v758
        %v761 = vmul.f32 %v598, %v758
        %v762 = vmul.f32 %v601, %v758
        %v763 = vmul.f32 %v604, %v758
        %v764 = vmul.f32 %v607, %v758
        %v765 = vmul.f32 %v610, %v758
        %v766 = vmul.f32 %v613, %v758
        %v767 = vmul.f32 %v616, %v758
        %v768 = vmul.f32 %v619, %v758
        %v769 = vmul.f32 %v622, %v758
        %v770 = vmul.f32 %v625, %v758
        %v771 = vmul.f32 %v628, %v758
        %v772 = vmul.f32 %v631, %v758
        %v773 = vmul.f32 %v634, %v758
        %v774 = vmul.f32 %v637, %v758
        %v775 = vmul.f32 %v640, %v758
        %v776 = vmul.f32 %v643, %v758
        %v777 = vmul.f32 %v646, %v758
        %v778 = vmul.f32 %v649, %v758
        %v779 = vmul.f32 %v652, %v758
        %v780 = vmul.f32 %v655, %v758
        %v781 = vmul.f32 %v658, %v758
        %v782 = vmul.f32 %v661, %v758
        %v783 = vmul.f32 %v664, %v758
        %v784 = vmul.f32 %v667, %v758
        %v785 = vmul.f32 %v670, %v758
        %v786 = vmul.f32 %v673, %v758
        %v787 = vmul.f32 %v676, %v758
        %v788 = vmul.f32 %v679, %v758
        %v789 = vmul.f32 %v682, %v758
        %v790 = vmul.f32 %v685, %v758
        %v791 = vmul.f32 %v688, %v758
        %v792 = vmul.f32 %v691, %v758
        %v793 = vmul.f32 %v694, %v758
        %v794 = vmul.f32 %v697, %v758
        %v795 = vmul.f32 %v700, %v758
        %v796 = vmul.f32 %v703, %v758
        %v797 = vmul.f32 %v706, %v758
        %v798 = vmul.f32 %v709, %v758
        %v799 = vmul.f32 %v712, %v758
        %v800 = vmul.f32 %v715, %v758
        %v801 = vmul.f32 %v718, %v758
        %v802 = vmul.f32 %v721, %v758
        %v803 = vmul.f32 %v724, %v758
        %v804 = vmul.f32 %v727, %v758
        %v805 = vmul.f32 %v730, %v758
        %v806 = vmul.f32 %v733, %v758
        %v807 = vmul.f32 %v736, %v758
        %v808 = vmul.f32 %v739, %v758
        %v809 = vmul.f32 %v742, %v758
        %v810 = vmul.f32 %v745, %v758
        %v811 = vmul.f32 %v748, %v758
        %v812 = vmul.f32 %v751, %v758
        %v813 = vmul.f32 %v754, %v758
        %v814 = vld [vmem:[%s3] sm:$0x1]
        %v816 = vperm.slane %v814, 0
        %v818 = vadd.f32 %v760, %v816
        %v819 = vadd.f32 %v761, %v816
        %v820 = vadd.f32 %v762, %v816
        %v821 = vadd.f32 %v763, %v816
        %v822 = vadd.f32 %v764, %v816
        %v823 = vadd.f32 %v765, %v816
        %v824 = vadd.f32 %v766, %v816
        %v825 = vadd.f32 %v767, %v816
        %v826 = vadd.f32 %v768, %v816
        %v827 = vadd.f32 %v769, %v816
        %v828 = vadd.f32 %v770, %v816
        %v829 = vadd.f32 %v771, %v816
        %v830 = vadd.f32 %v772, %v816
        %v831 = vadd.f32 %v773, %v816
        %v832 = vadd.f32 %v774, %v816
        %v833 = vadd.f32 %v775, %v816
        %v834 = vadd.f32 %v776, %v816
        %v835 = vadd.f32 %v777, %v816
        %v836 = vadd.f32 %v778, %v816
        %v837 = vadd.f32 %v779, %v816
        %v838 = vadd.f32 %v780, %v816
        %v839 = vadd.f32 %v781, %v816
        %v840 = vadd.f32 %v782, %v816
        %v841 = vadd.f32 %v783, %v816
        %v842 = vadd.f32 %v784, %v816
        %v843 = vadd.f32 %v785, %v816
        %v844 = vadd.f32 %v786, %v816
        %v845 = vadd.f32 %v787, %v816
        %v846 = vadd.f32 %v788, %v816
        %v847 = vadd.f32 %v789, %v816
        %v848 = vadd.f32 %v790, %v816
        %v849 = vadd.f32 %v791, %v816
        %v850 = vadd.f32 %v792, %v816
        %v851 = vadd.f32 %v793, %v816
        %v852 = vadd.f32 %v794, %v816
        %v853 = vadd.f32 %v795, %v816
        %v854 = vadd.f32 %v796, %v816
        %v855 = vadd.f32 %v797, %v816
        %v856 = vadd.f32 %v798, %v816
        %v857 = vadd.f32 %v799, %v816
        %v858 = vadd.f32 %v800, %v816
        %v859 = vadd.f32 %v801, %v816
        %v860 = vadd.f32 %v802, %v816
        %v861 = vadd.f32 %v803, %v816
        %v862 = vadd.f32 %v804, %v816
        %v863 = vadd.f32 %v805, %v816
        %v864 = vadd.f32 %v806, %v816
        %v865 = vadd.f32 %v807, %v816
        %v866 = vadd.f32 %v808, %v816
        %v867 = vadd.f32 %v809, %v816
        %v868 = vadd.f32 %v810, %v816
        %v869 = vadd.f32 %v811, %v816
        %v870 = vadd.f32 %v812, %v816
        %v871 = vadd.f32 %v813, %v816
        %v872 = vmax.f32 %v818, 0.0
        %v873 = vmax.f32 %v819, 0.0
        %v874 = vmax.f32 %v820, 0.0
        %v875 = vmax.f32 %v821, 0.0
        %v876 = vmax.f32 %v822, 0.0
        %v877 = vmax.f32 %v823, 0.0
        %v878 = vmax.f32 %v824, 0.0
        %v879 = vmax.f32 %v825, 0.0
        %v880 = vmax.f32 %v826, 0.0
        %v881 = vmax.f32 %v827, 0.0
        %v882 = vmax.f32 %v828, 0.0
        %v883 = vmax.f32 %v829, 0.0
        %v884 = vmax.f32 %v830, 0.0
        %v885 = vmax.f32 %v831, 0.0
        %v886 = vmax.f32 %v832, 0.0
        %v887 = vmax.f32 %v833, 0.0
        %v888 = vmax.f32 %v834, 0.0
        %v889 = vmax.f32 %v835, 0.0
        %v890 = vmax.f32 %v836, 0.0
        %v891 = vmax.f32 %v837, 0.0
        %v892 = vmax.f32 %v838, 0.0
        %v893 = vmax.f32 %v839, 0.0
        %v894 = vmax.f32 %v840, 0.0
        %v895 = vmax.f32 %v841, 0.0
        %v896 = vmax.f32 %v842, 0.0
        %v897 = vmax.f32 %v843, 0.0
        %v898 = vmax.f32 %v844, 0.0
        %v899 = vmax.f32 %v845, 0.0
        %v900 = vmax.f32 %v846, 0.0
        %v901 = vmax.f32 %v847, 0.0
        %v902 = vmax.f32 %v848, 0.0
        %v903 = vmax.f32 %v849, 0.0
        %v904 = vmax.f32 %v850, 0.0
        %v905 = vmax.f32 %v851, 0.0
        %v906 = vmax.f32 %v852, 0.0
        %v907 = vmax.f32 %v853, 0.0
        %v908 = vmax.f32 %v854, 0.0
        %v909 = vmax.f32 %v855, 0.0
        %v910 = vmax.f32 %v856, 0.0
        %v911 = vmax.f32 %v857, 0.0
        %v912 = vmax.f32 %v858, 0.0
        %v913 = vmax.f32 %v859, 0.0
        %v914 = vmax.f32 %v860, 0.0
        %v915 = vmax.f32 %v861, 0.0
        %v916 = vmax.f32 %v862, 0.0
        %v917 = vmax.f32 %v863, 0.0
        %v918 = vmax.f32 %v864, 0.0
        %v919 = vmax.f32 %v865, 0.0
        %v920 = vmax.f32 %v866, 0.0
        %v921 = vmax.f32 %v867, 0.0
        %v922 = vmax.f32 %v868, 0.0
        %v923 = vmax.f32 %v869, 0.0
        %v924 = vmax.f32 %v870, 0.0
        %v925 = vmax.f32 %v871, 0.0
        %v926 = vlaneseq
        %v927 = vshrl.u32 %v926, 7
        %v928 = vadd.s32 %v927, 8
        %v929 = vadd.s32 %v927, 16
        %vm930 = vcmp.ge.s32.totalorder %v927, 1
        %vm931 = vcmp.ge.s32.totalorder %v928, 1
        %vm932 = vcmp.ge.s32.totalorder %v929, 1
        %vm933 = vmand 0, %vm930
        %vm934 = vmand 0, %vm931
        %vm935 = vmand 0, %vm932
        %vm936 = vmand 1, %vm930
        %vm937 = vmand 1, %vm931
        %vm938 = vmand 1, %vm932
        %vm939 = vcmp.le.s32.totalorder %v927, 16
        %vm940 = vcmp.le.s32.totalorder %v928, 16
        %vm941 = vcmp.le.s32.totalorder %v929, 16
        %vm942 = vmand %vm933, %vm939
        %vm943 = vmand %vm934, %vm940
        %vm944 = vmand %vm935, %vm941
        %vm945 = vmand %vm936, %vm939
        %vm946 = vmand %vm937, %vm940
        %vm947 = vmand %vm938, %vm941
        %v948 = vsel %vm942, 1, 0
        %v949 = vsel %vm943, 1, 0
        %v950 = vsel %vm944, 1, 0
        %v951 = vsel %vm945, 1, 0
        %v952 = vsel %vm946, 1, 0
        %v953 = vsel %vm947, 1, 0
        %v954 = vcvt.s32.f32 %v948
        %v955 = vcvt.s32.f32 %v949
        %v956 = vcvt.s32.f32 %v950
        %v957 = vcvt.s32.f32 %v951
        %v958 = vcvt.s32.f32 %v952
        %v959 = vcvt.s32.f32 %v953
        %v960 = vmul.f32 %v872, %v954
        %v961 = vmul.f32 %v873, %v955
        %v962 = vmul.f32 %v874, %v956
        %v963 = vmul.f32 %v875, %v957
        %v964 = vmul.f32 %v876, %v958
        %v965 = vmul.f32 %v877, %v959
        %v966 = vmul.f32 %v878, %v957
        %v967 = vmul.f32 %v879, %v958
        %v968 = vmul.f32 %v880, %v959
        %v969 = vmul.f32 %v881, %v957
        %v970 = vmul.f32 %v882, %v958
        %v971 = vmul.f32 %v883, %v959
        %v972 = vmul.f32 %v884, %v957
        %v973 = vmul.f32 %v885, %v958
        %v974 = vmul.f32 %v886, %v959
        %v975 = vmul.f32 %v887, %v957
        %v976 = vmul.f32 %v888, %v958
        %v977 = vmul.f32 %v889, %v959
        %v978 = vmul.f32 %v890, %v957
        %v979 = vmul.f32 %v891, %v958
        %v980 = vmul.f32 %v892, %v959
        %v981 = vmul.f32 %v893, %v957
        %v982 = vmul.f32 %v894, %v958
        %v983 = vmul.f32 %v895, %v959
        %v984 = vmul.f32 %v896, %v957
        %v985 = vmul.f32 %v897, %v958
        %v986 = vmul.f32 %v898, %v959
        %v987 = vmul.f32 %v899, %v957
        %v988 = vmul.f32 %v900, %v958
        %v989 = vmul.f32 %v901, %v959
        %v990 = vmul.f32 %v902, %v957
        %v991 = vmul.f32 %v903, %v958
        %v992 = vmul.f32 %v904, %v959
        %v993 = vmul.f32 %v905, %v957
        %v994 = vmul.f32 %v906, %v958
        %v995 = vmul.f32 %v907, %v959
        %v996 = vmul.f32 %v908, %v957
        %v997 = vmul.f32 %v909, %v958
        %v998 = vmul.f32 %v910, %v959
        %v999 = vmul.f32 %v911, %v957
        %v1000 = vmul.f32 %v912, %v958
        %v1001 = vmul.f32 %v913, %v959
        %v1002 = vmul.f32 %v914, %v957
        %v1003 = vmul.f32 %v915, %v958
        %v1004 = vmul.f32 %v916, %v959
        %v1005 = vmul.f32 %v917, %v957
        %v1006 = vmul.f32 %v918, %v958
        %v1007 = vmul.f32 %v919, %v959
        %v1008 = vmul.f32 %v920, %v957
        %v1009 = vmul.f32 %v921, %v958
        %v1010 = vmul.f32 %v922, %v959
        %v1011 = vmul.f32 %v923, %v954
        %v1012 = vmul.f32 %v924, %v955
        %v1013 = vmul.f32 %v925, %v956
        %vm1068 = vcmask 1046528
        %v1069 = vrot.slane %v960, 1
        %v1070 = vrot.slane %v961, 1
        %v1071 = vsel %vm1068, %v1069, %v1070
        %v1072 = vrot.slane %v962, 1
        %v1073 = vsel %vm1068, %v1070, %v1072
        %v1074 = vrot.slane %v963, 1
        %v1075 = vrot.slane %v964, 1
        %v1076 = vsel %vm1068, %v1074, %v1075
        %v1077 = vrot.slane %v965, 1
        %v1078 = vsel %vm1068, %v1075, %v1077
        %v1079 = vrot.slane %v966, 1
        %v1080 = vrot.slane %v967, 1
        %v1081 = vsel %vm1068, %v1079, %v1080
        %v1082 = vrot.slane %v968, 1
        %v1083 = vsel %vm1068, %v1080, %v1082
        %v1084 = vrot.slane %v969, 1
        %v1085 = vrot.slane %v970, 1
        %v1086 = vsel %vm1068, %v1084, %v1085
        %v1087 = vrot.slane %v971, 1
        %v1088 = vsel %vm1068, %v1085, %v1087
        %v1089 = vrot.slane %v972, 1
        %v1090 = vrot.slane %v973, 1
        %v1091 = vsel %vm1068, %v1089, %v1090
        %v1092 = vrot.slane %v974, 1
        %v1093 = vsel %vm1068, %v1090, %v1092
        %v1094 = vrot.slane %v975, 1
        %v1095 = vrot.slane %v976, 1
        %v1096 = vsel %vm1068, %v1094, %v1095
        %v1097 = vrot.slane %v977, 1
        %v1098 = vsel %vm1068, %v1095, %v1097
        %v1099 = vrot.slane %v978, 1
        %v1100 = vrot.slane %v979, 1
        %v1101 = vsel %vm1068, %v1099, %v1100
        %v1102 = vrot.slane %v980, 1
        %v1103 = vsel %vm1068, %v1100, %v1102
        %v1104 = vrot.slane %v981, 1
        %v1105 = vrot.slane %v982, 1
        %v1106 = vsel %vm1068, %v1104, %v1105
        %v1107 = vrot.slane %v983, 1
        %v1108 = vsel %vm1068, %v1105, %v1107
        %v1109 = vrot.slane %v984, 1
        %v1110 = vrot.slane %v985, 1
        %v1111 = vsel %vm1068, %v1109, %v1110
        %v1112 = vrot.slane %v986, 1
        %v1113 = vsel %vm1068, %v1110, %v1112
        %v1114 = vrot.slane %v987, 1
        %v1115 = vrot.slane %v988, 1
        %v1116 = vsel %vm1068, %v1114, %v1115
        %v1117 = vrot.slane %v989, 1
        %v1118 = vsel %vm1068, %v1115, %v1117
        %v1119 = vrot.slane %v990, 1
        %v1120 = vrot.slane %v991, 1
        %v1121 = vsel %vm1068, %v1119, %v1120
        %v1122 = vrot.slane %v992, 1
        %v1123 = vsel %vm1068, %v1120, %v1122
        %v1124 = vrot.slane %v993, 1
        %v1125 = vrot.slane %v994, 1
        %v1126 = vsel %vm1068, %v1124, %v1125
        %v1127 = vrot.slane %v995, 1
        %v1128 = vsel %vm1068, %v1125, %v1127
        %v1129 = vrot.slane %v996, 1
        %v1130 = vrot.slane %v997, 1
        %v1131 = vsel %vm1068, %v1129, %v1130
        %v1132 = vrot.slane %v998, 1
        %v1133 = vsel %vm1068, %v1130, %v1132
        %v1134 = vrot.slane %v999, 1
        %v1135 = vrot.slane %v1000, 1
        %v1136 = vsel %vm1068, %v1134, %v1135
        %v1137 = vrot.slane %v1001, 1
        %v1138 = vsel %vm1068, %v1135, %v1137
        %v1139 = vrot.slane %v1002, 1
        %v1140 = vrot.slane %v1003, 1
        %v1141 = vsel %vm1068, %v1139, %v1140
        %v1142 = vrot.slane %v1004, 1
        %v1143 = vsel %vm1068, %v1140, %v1142
        %v1144 = vrot.slane %v1005, 1
        %v1145 = vrot.slane %v1006, 1
        %v1146 = vsel %vm1068, %v1144, %v1145
        %v1147 = vrot.slane %v1007, 1
        %v1148 = vsel %vm1068, %v1145, %v1147
        %v1149 = vrot.slane %v1008, 1
        %v1150 = vrot.slane %v1009, 1
        %v1151 = vsel %vm1068, %v1149, %v1150
        %v1152 = vrot.slane %v1010, 1
        %v1153 = vsel %vm1068, %v1150, %v1152
        %v1154 = vrot.slane %v1011, 1
        %v1155 = vrot.slane %v1012, 1
        %v1156 = vsel %vm1068, %v1154, %v1155
        %v1157 = vrot.slane %v1013, 1
        %v1158 = vsel %vm1068, %v1155, %v1157
        %1159 = vrot.lane.b32.xlu0 %v1071, 4
        %v1160 = vpop.permute.xlu0 %1159
        %1161 = vrot.lane.b32.xlu0 %v1073, 4
        %v1162 = vpop.permute.xlu0 %1161
        %1163 = vrot.lane.b32.xlu0 %v1076, 4
        %v1164 = vpop.permute.xlu0 %1163
        %1165 = vrot.lane.b32.xlu0 %v1078, 4
        %v1166 = vpop.permute.xlu0 %1165
        %1167 = vrot.lane.b32.xlu0 %v1081, 4
        %v1168 = vpop.permute.xlu0 %1167
        %1169 = vrot.lane.b32.xlu0 %v1083, 4
        %v1170 = vpop.permute.xlu0 %1169
        %1171 = vrot.lane.b32.xlu0 %v1086, 4
        %v1172 = vpop.permute.xlu0 %1171
        %1173 = vrot.lane.b32.xlu0 %v1088, 4
        %v1174 = vpop.permute.xlu0 %1173
        %1175 = vrot.lane.b32.xlu0 %v1091, 4
        %v1176 = vpop.permute.xlu0 %1175
        %1177 = vrot.lane.b32.xlu0 %v1093, 4
        %v1178 = vpop.permute.xlu0 %1177
        %1179 = vrot.lane.b32.xlu0 %v1096, 4
        %v1180 = vpop.permute.xlu0 %1179
        %1181 = vrot.lane.b32.xlu0 %v1098, 4
        %v1182 = vpop.permute.xlu0 %1181
        %1183 = vrot.lane.b32.xlu0 %v1101, 4
        %v1184 = vpop.permute.xlu0 %1183
        %1185 = vrot.lane.b32.xlu0 %v1103, 4
        %v1186 = vpop.permute.xlu0 %1185
        %1187 = vrot.lane.b32.xlu0 %v1106, 4
        %v1188 = vpop.permute.xlu0 %1187
        %1189 = vrot.lane.b32.xlu0 %v1108, 4
        %v1190 = vpop.permute.xlu0 %1189
        %1191 = vrot.lane.b32.xlu0 %v1111, 4
        %v1192 = vpop.permute.xlu0 %1191
        %1193 = vrot.lane.b32.xlu0 %v1113, 4
        %v1194 = vpop.permute.xlu0 %1193
        %1195 = vrot.lane.b32.xlu0 %v1116, 4
        %v1196 = vpop.permute.xlu0 %1195
        %1197 = vrot.lane.b32.xlu0 %v1118, 4
        %v1198 = vpop.permute.xlu0 %1197
        %1199 = vrot.lane.b32.xlu0 %v1121, 4
        %v1200 = vpop.permute.xlu0 %1199
        %1201 = vrot.lane.b32.xlu0 %v1123, 4
        %v1202 = vpop.permute.xlu0 %1201
        %1203 = vrot.lane.b32.xlu0 %v1126, 4
        %v1204 = vpop.permute.xlu0 %1203
        %1205 = vrot.lane.b32.xlu0 %v1128, 4
        %v1206 = vpop.permute.xlu0 %1205
        %1207 = vrot.lane.b32.xlu0 %v1131, 4
        %v1208 = vpop.permute.xlu0 %1207
        %1209 = vrot.lane.b32.xlu0 %v1133, 4
        %v1210 = vpop.permute.xlu0 %1209
        %1211 = vrot.lane.b32.xlu0 %v1136, 4
        %v1212 = vpop.permute.xlu0 %1211
        %1213 = vrot.lane.b32.xlu0 %v1138, 4
        %v1214 = vpop.permute.xlu0 %1213
        %1215 = vrot.lane.b32.xlu0 %v1141, 4
        %v1216 = vpop.permute.xlu0 %1215
        %1217 = vrot.lane.b32.xlu0 %v1143, 4
        %v1218 = vpop.permute.xlu0 %1217
        %1219 = vrot.lane.b32.xlu0 %v1146, 4
        %v1220 = vpop.permute.xlu0 %1219
        %1221 = vrot.lane.b32.xlu0 %v1148, 4
        %v1222 = vpop.permute.xlu0 %1221
        %1223 = vrot.lane.b32.xlu0 %v1151, 4
        %v1224 = vpop.permute.xlu0 %1223
        %1225 = vrot.lane.b32.xlu0 %v1153, 4
        %v1226 = vpop.permute.xlu0 %1225
        %1227 = vrot.lane.b32.xlu0 %v1156, 4
        %v1228 = vpop.permute.xlu0 %1227
        %1229 = vrot.lane.b32.xlu0 %v1158, 4
        %v1230 = vpop.permute.xlu0 %1229
        %vm1267 = vcmask 1045504
        %v1268 = vrot.slane %v960, 2
        %v1269 = vrot.slane %v961, 2
        %v1270 = vsel %vm1267, %v1268, %v1269
        %v1271 = vrot.slane %v962, 2
        %v1272 = vsel %vm1267, %v1269, %v1271
        %v1273 = vrot.slane %v963, 2
        %v1274 = vrot.slane %v964, 2
        %v1275 = vsel %vm1267, %v1273, %v1274
        %v1276 = vrot.slane %v965, 2
        %v1277 = vsel %vm1267, %v1274, %v1276
        %v1278 = vrot.slane %v966, 2
        %v1279 = vrot.slane %v967, 2
        %v1280 = vsel %vm1267, %v1278, %v1279
        %v1281 = vrot.slane %v968, 2
        %v1282 = vsel %vm1267, %v1279, %v1281
        %v1283 = vrot.slane %v969, 2
        %v1284 = vrot.slane %v970, 2
        %v1285 = vsel %vm1267, %v1283, %v1284
        %v1286 = vrot.slane %v971, 2
        %v1287 = vsel %vm1267, %v1284, %v1286
        %v1288 = vrot.slane %v972, 2
        %v1289 = vrot.slane %v973, 2
        %v1290 = vsel %vm1267, %v1288, %v1289
        %v1291 = vrot.slane %v974, 2
        %v1292 = vsel %vm1267, %v1289, %v1291
        %v1293 = vrot.slane %v975, 2
        %v1294 = vrot.slane %v976, 2
        %v1295 = vsel %vm1267, %v1293, %v1294
        %v1296 = vrot.slane %v977, 2
        %v1297 = vsel %vm1267, %v1294, %v1296
        %v1298 = vrot.slane %v978, 2
        %v1299 = vrot.slane %v979, 2
        %v1300 = vsel %vm1267, %v1298, %v1299
        %v1301 = vrot.slane %v980, 2
        %v1302 = vsel %vm1267, %v1299, %v1301
        %v1303 = vrot.slane %v981, 2
        %v1304 = vrot.slane %v982, 2
        %v1305 = vsel %vm1267, %v1303, %v1304
        %v1306 = vrot.slane %v983, 2
        %v1307 = vsel %vm1267, %v1304, %v1306
        %v1308 = vrot.slane %v984, 2
        %v1309 = vrot.slane %v985, 2
        %v1310 = vsel %vm1267, %v1308, %v1309
        %v1311 = vrot.slane %v986, 2
        %v1312 = vsel %vm1267, %v1309, %v1311
        %v1313 = vrot.slane %v987, 2
        %v1314 = vrot.slane %v988, 2
        %v1315 = vsel %vm1267, %v1313, %v1314
        %v1316 = vrot.slane %v989, 2
        %v1317 = vsel %vm1267, %v1314, %v1316
        %v1318 = vrot.slane %v990, 2
        %v1319 = vrot.slane %v991, 2
        %v1320 = vsel %vm1267, %v1318, %v1319
        %v1321 = vrot.slane %v992, 2
        %v1322 = vsel %vm1267, %v1319, %v1321
        %v1323 = vrot.slane %v993, 2
        %v1324 = vrot.slane %v994, 2
        %v1325 = vsel %vm1267, %v1323, %v1324
        %v1326 = vrot.slane %v995, 2
        %v1327 = vsel %vm1267, %v1324, %v1326
        %v1328 = vrot.slane %v996, 2
        %v1329 = vrot.slane %v997, 2
        %v1330 = vsel %vm1267, %v1328, %v1329
        %v1331 = vrot.slane %v998, 2
        %v1332 = vsel %vm1267, %v1329, %v1331
        %v1333 = vrot.slane %v999, 2
        %v1334 = vrot.slane %v1000, 2
        %v1335 = vsel %vm1267, %v1333, %v1334
        %v1336 = vrot.slane %v1001, 2
        %v1337 = vsel %vm1267, %v1334, %v1336
        %v1338 = vrot.slane %v1002, 2
        %v1339 = vrot.slane %v1003, 2
        %v1340 = vsel %vm1267, %v1338, %v1339
        %v1341 = vrot.slane %v1004, 2
        %v1342 = vsel %vm1267, %v1339, %v1341
        %v1343 = vrot.slane %v1005, 2
        %v1344 = vrot.slane %v1006, 2
        %v1345 = vsel %vm1267, %v1343, %v1344
        %v1346 = vrot.slane %v1007, 2
        %v1347 = vsel %vm1267, %v1344, %v1346
        %v1348 = vrot.slane %v1008, 2
        %v1349 = vrot.slane %v1009, 2
        %v1350 = vsel %vm1267, %v1348, %v1349
        %v1351 = vrot.slane %v1010, 2
        %v1352 = vsel %vm1267, %v1349, %v1351
        %v1353 = vrot.slane %v1011, 2
        %v1354 = vrot.slane %v1012, 2
        %v1355 = vsel %vm1267, %v1353, %v1354
        %v1356 = vrot.slane %v1013, 2
        %v1357 = vsel %vm1267, %v1354, %v1356
        %1358 = vrot.lane.b32.xlu0 %v1270, 8
        %v1359 = vpop.permute.xlu0 %1358
        %1360 = vrot.lane.b32.xlu0 %v1272, 8
        %v1361 = vpop.permute.xlu0 %1360
        %1362 = vrot.lane.b32.xlu0 %v1275, 8
        %v1363 = vpop.permute.xlu0 %1362
        %1364 = vrot.lane.b32.xlu0 %v1277, 8
        %v1365 = vpop.permute.xlu0 %1364
        %1366 = vrot.lane.b32.xlu0 %v1280, 8
        %v1367 = vpop.permute.xlu0 %1366
        %1368 = vrot.lane.b32.xlu0 %v1282, 8
        %v1369 = vpop.permute.xlu0 %1368
        %1370 = vrot.lane.b32.xlu0 %v1285, 8
        %v1371 = vpop.permute.xlu0 %1370
        %1372 = vrot.lane.b32.xlu0 %v1287, 8
        %v1373 = vpop.permute.xlu0 %1372
        %1374 = vrot.lane.b32.xlu0 %v1290, 8
        %v1375 = vpop.permute.xlu0 %1374
        %1376 = vrot.lane.b32.xlu0 %v1292, 8
        %v1377 = vpop.permute.xlu0 %1376
        %1378 = vrot.lane.b32.xlu0 %v1295, 8
        %v1379 = vpop.permute.xlu0 %1378
        %1380 = vrot.lane.b32.xlu0 %v1297, 8
        %v1381 = vpop.permute.xlu0 %1380
        %1382 = vrot.lane.b32.xlu0 %v1300, 8
        %v1383 = vpop.permute.xlu0 %1382
        %1384 = vrot.lane.b32.xlu0 %v1302, 8
        %v1385 = vpop.permute.xlu0 %1384
        %1386 = vrot.lane.b32.xlu0 %v1305, 8
        %v1387 = vpop.permute.xlu0 %1386
        %1388 = vrot.lane.b32.xlu0 %v1307, 8
        %v1389 = vpop.permute.xlu0 %1388
        %1390 = vrot.lane.b32.xlu0 %v1310, 8
        %v1391 = vpop.permute.xlu0 %1390
        %1392 = vrot.lane.b32.xlu0 %v1312, 8
        %v1393 = vpop.permute.xlu0 %1392
        %1394 = vrot.lane.b32.xlu0 %v1315, 8
        %v1395 = vpop.permute.xlu0 %1394
        %1396 = vrot.lane.b32.xlu0 %v1317, 8
        %v1397 = vpop.permute.xlu0 %1396
        %1398 = vrot.lane.b32.xlu0 %v1320, 8
        %v1399 = vpop.permute.xlu0 %1398
        %1400 = vrot.lane.b32.xlu0 %v1322, 8
        %v1401 = vpop.permute.xlu0 %1400
        %1402 = vrot.lane.b32.xlu0 %v1325, 8
        %v1403 = vpop.permute.xlu0 %1402
        %1404 = vrot.lane.b32.xlu0 %v1327, 8
        %v1405 = vpop.permute.xlu0 %1404
        %1406 = vrot.lane.b32.xlu0 %v1330, 8
        %v1407 = vpop.permute.xlu0 %1406
        %1408 = vrot.lane.b32.xlu0 %v1332, 8
        %v1409 = vpop.permute.xlu0 %1408
        %1410 = vrot.lane.b32.xlu0 %v1335, 8
        %v1411 = vpop.permute.xlu0 %1410
        %1412 = vrot.lane.b32.xlu0 %v1337, 8
        %v1413 = vpop.permute.xlu0 %1412
        %1414 = vrot.lane.b32.xlu0 %v1340, 8
        %v1415 = vpop.permute.xlu0 %1414
        %1416 = vrot.lane.b32.xlu0 %v1342, 8
        %v1417 = vpop.permute.xlu0 %1416
        %1418 = vrot.lane.b32.xlu0 %v1345, 8
        %v1419 = vpop.permute.xlu0 %1418
        %1420 = vrot.lane.b32.xlu0 %v1347, 8
        %v1421 = vpop.permute.xlu0 %1420
        %1422 = vrot.lane.b32.xlu0 %v1350, 8
        %v1423 = vpop.permute.xlu0 %1422
        %1424 = vrot.lane.b32.xlu0 %v1352, 8
        %v1425 = vpop.permute.xlu0 %1424
        %1426 = vrot.lane.b32.xlu0 %v1355, 8
        %v1427 = vpop.permute.xlu0 %1426
        %1428 = vrot.lane.b32.xlu0 %v1357, 8
        %v1429 = vpop.permute.xlu0 %1428
        %vm1466 = vcmask 31744
        %v1467 = vsel %vm1466, %v960, %v1160
        %v1468 = vsel %vm1466, %v961, %v1162
        %v1469 = vsel %vm1466, %v963, %v1164
        %v1470 = vsel %vm1466, %v964, %v1166
        %v1471 = vsel %vm1466, %v966, %v1168
        %v1472 = vsel %vm1466, %v967, %v1170
        %v1473 = vsel %vm1466, %v969, %v1172
        %v1474 = vsel %vm1466, %v970, %v1174
        %v1475 = vsel %vm1466, %v972, %v1176
        %v1476 = vsel %vm1466, %v973, %v1178
        %v1477 = vsel %vm1466, %v975, %v1180
        %v1478 = vsel %vm1466, %v976, %v1182
        %v1479 = vsel %vm1466, %v978, %v1184
        %v1480 = vsel %vm1466, %v979, %v1186
        %v1481 = vsel %vm1466, %v981, %v1188
        %v1482 = vsel %vm1466, %v982, %v1190
        %v1483 = vsel %vm1466, %v984, %v1192
        %v1484 = vsel %vm1466, %v985, %v1194
        %v1485 = vsel %vm1466, %v987, %v1196
        %v1486 = vsel %vm1466, %v988, %v1198
        %v1487 = vsel %vm1466, %v990, %v1200
        %v1488 = vsel %vm1466, %v991, %v1202
        %v1489 = vsel %vm1466, %v993, %v1204
        %v1490 = vsel %vm1466, %v994, %v1206
        %v1491 = vsel %vm1466, %v996, %v1208
        %v1492 = vsel %vm1466, %v997, %v1210
        %v1493 = vsel %vm1466, %v999, %v1212
        %v1494 = vsel %vm1466, %v1000, %v1214
        %v1495 = vsel %vm1466, %v1002, %v1216
        %v1496 = vsel %vm1466, %v1003, %v1218
        %v1497 = vsel %vm1466, %v1005, %v1220
        %v1498 = vsel %vm1466, %v1006, %v1222
        %v1499 = vsel %vm1466, %v1008, %v1224
        %v1500 = vsel %vm1466, %v1009, %v1226
        %v1501 = vsel %vm1466, %v1011, %v1228
        %v1502 = vsel %vm1466, %v1012, %v1230
        %vm1503 = vcmask 64512
        %v1504 = vsel %vm1503, %v1467, %v1359
        %v1505 = vsel %vm1503, %v1468, %v1361
        %v1506 = vsel %vm1503, %v1469, %v1363
        %v1507 = vsel %vm1503, %v1470, %v1365
        %v1508 = vsel %vm1503, %v1471, %v1367
        %v1509 = vsel %vm1503, %v1472, %v1369
        %v1510 = vsel %vm1503, %v1473, %v1371
        %v1511 = vsel %vm1503, %v1474, %v1373
        %v1512 = vsel %vm1503, %v1475, %v1375
        %v1513 = vsel %vm1503, %v1476, %v1377
        %v1514 = vsel %vm1503, %v1477, %v1379
        %v1515 = vsel %vm1503, %v1478, %v1381
        %v1516 = vsel %vm1503, %v1479, %v1383
        %v1517 = vsel %vm1503, %v1480, %v1385
        %v1518 = vsel %vm1503, %v1481, %v1387
        %v1519 = vsel %vm1503, %v1482, %v1389
        %v1520 = vsel %vm1503, %v1483, %v1391
        %v1521 = vsel %vm1503, %v1484, %v1393
        %v1522 = vsel %vm1503, %v1485, %v1395
        %v1523 = vsel %vm1503, %v1486, %v1397
        %v1524 = vsel %vm1503, %v1487, %v1399
        %v1525 = vsel %vm1503, %v1488, %v1401
        %v1526 = vsel %vm1503, %v1489, %v1403
        %v1527 = vsel %vm1503, %v1490, %v1405
        %v1528 = vsel %vm1503, %v1491, %v1407
        %v1529 = vsel %vm1503, %v1492, %v1409
        %v1530 = vsel %vm1503, %v1493, %v1411
        %v1531 = vsel %vm1503, %v1494, %v1413
        %v1532 = vsel %vm1503, %v1495, %v1415
        %v1533 = vsel %vm1503, %v1496, %v1417
        %v1534 = vsel %vm1503, %v1497, %v1419
        %v1535 = vsel %vm1503, %v1498, %v1421
        %v1536 = vsel %vm1503, %v1499, %v1423
        %v1537 = vsel %vm1503, %v1500, %v1425
        %v1538 = vsel %vm1503, %v1501, %v1427
        %v1539 = vsel %vm1503, %v1502, %v1429
        %1572 = vrot.lane.b32.xlu0 %v1506, 12
        %v1573 = vpop.permute.xlu0 %1572
        %1574 = vrot.lane.b32.xlu0 %v1507, 12
        %v1575 = vpop.permute.xlu0 %1574
        %1576 = vrot.lane.b32.xlu0 %v1508, 12
        %v1577 = vpop.permute.xlu0 %1576
        %1578 = vrot.lane.b32.xlu0 %v1509, 12
        %v1579 = vpop.permute.xlu0 %1578
        %1580 = vrot.lane.b32.xlu0 %v1510, 12
        %v1581 = vpop.permute.xlu0 %1580
        %1582 = vrot.lane.b32.xlu0 %v1511, 12
        %v1583 = vpop.permute.xlu0 %1582
        %1584 = vrot.lane.b32.xlu0 %v1512, 12
        %v1585 = vpop.permute.xlu0 %1584
        %1586 = vrot.lane.b32.xlu0 %v1513, 12
        %v1587 = vpop.permute.xlu0 %1586
        %1588 = vrot.lane.b32.xlu0 %v1514, 12
        %v1589 = vpop.permute.xlu0 %1588
        %1590 = vrot.lane.b32.xlu0 %v1515, 12
        %v1591 = vpop.permute.xlu0 %1590
        %1592 = vrot.lane.b32.xlu0 %v1516, 12
        %v1593 = vpop.permute.xlu0 %1592
        %1594 = vrot.lane.b32.xlu0 %v1517, 12
        %v1595 = vpop.permute.xlu0 %1594
        %1596 = vrot.lane.b32.xlu0 %v1518, 12
        %v1597 = vpop.permute.xlu0 %1596
        %1598 = vrot.lane.b32.xlu0 %v1519, 12
        %v1599 = vpop.permute.xlu0 %1598
        %1600 = vrot.lane.b32.xlu0 %v1520, 12
        %v1601 = vpop.permute.xlu0 %1600
        %1602 = vrot.lane.b32.xlu0 %v1521, 12
        %v1603 = vpop.permute.xlu0 %1602
        %1604 = vrot.lane.b32.xlu0 %v1522, 12
        %v1605 = vpop.permute.xlu0 %1604
        %1606 = vrot.lane.b32.xlu0 %v1523, 12
        %v1607 = vpop.permute.xlu0 %1606
        %1608 = vrot.lane.b32.xlu0 %v1524, 12
        %v1609 = vpop.permute.xlu0 %1608
        %1610 = vrot.lane.b32.xlu0 %v1525, 12
        %v1611 = vpop.permute.xlu0 %1610
        %1612 = vrot.lane.b32.xlu0 %v1526, 12
        %v1613 = vpop.permute.xlu0 %1612
        %1614 = vrot.lane.b32.xlu0 %v1527, 12
        %v1615 = vpop.permute.xlu0 %1614
        %1616 = vrot.lane.b32.xlu0 %v1528, 12
        %v1617 = vpop.permute.xlu0 %1616
        %1618 = vrot.lane.b32.xlu0 %v1529, 12
        %v1619 = vpop.permute.xlu0 %1618
        %1620 = vrot.lane.b32.xlu0 %v1530, 12
        %v1621 = vpop.permute.xlu0 %1620
        %1622 = vrot.lane.b32.xlu0 %v1531, 12
        %v1623 = vpop.permute.xlu0 %1622
        %1624 = vrot.lane.b32.xlu0 %v1532, 12
        %v1625 = vpop.permute.xlu0 %1624
        %1626 = vrot.lane.b32.xlu0 %v1533, 12
        %v1627 = vpop.permute.xlu0 %1626
        %1628 = vrot.lane.b32.xlu0 %v1534, 12
        %v1629 = vpop.permute.xlu0 %1628
        %1630 = vrot.lane.b32.xlu0 %v1535, 12
        %v1631 = vpop.permute.xlu0 %1630
        %1632 = vrot.lane.b32.xlu0 %v1536, 12
        %v1633 = vpop.permute.xlu0 %1632
        %1634 = vrot.lane.b32.xlu0 %v1537, 12
        %v1635 = vpop.permute.xlu0 %1634
        %1670 = vrot.lane.b32.xlu0 %v1508, 24
        %v1671 = vpop.permute.xlu0 %1670
        %1672 = vrot.lane.b32.xlu0 %v1509, 24
        %v1673 = vpop.permute.xlu0 %1672
        %1674 = vrot.lane.b32.xlu0 %v1510, 24
        %v1675 = vpop.permute.xlu0 %1674
        %1676 = vrot.lane.b32.xlu0 %v1511, 24
        %v1677 = vpop.permute.xlu0 %1676
        %1678 = vrot.lane.b32.xlu0 %v1512, 24
        %v1679 = vpop.permute.xlu0 %1678
        %1680 = vrot.lane.b32.xlu0 %v1513, 24
        %v1681 = vpop.permute.xlu0 %1680
        %1682 = vrot.lane.b32.xlu0 %v1514, 24
        %v1683 = vpop.permute.xlu0 %1682
        %1684 = vrot.lane.b32.xlu0 %v1515, 24
        %v1685 = vpop.permute.xlu0 %1684
        %1686 = vrot.lane.b32.xlu0 %v1516, 24
        %v1687 = vpop.permute.xlu0 %1686
        %1688 = vrot.lane.b32.xlu0 %v1517, 24
        %v1689 = vpop.permute.xlu0 %1688
        %1690 = vrot.lane.b32.xlu0 %v1518, 24
        %v1691 = vpop.permute.xlu0 %1690
        %1692 = vrot.lane.b32.xlu0 %v1519, 24
        %v1693 = vpop.permute.xlu0 %1692
        %1694 = vrot.lane.b32.xlu0 %v1520, 24
        %v1695 = vpop.permute.xlu0 %1694
        %1696 = vrot.lane.b32.xlu0 %v1521, 24
        %v1697 = vpop.permute.xlu0 %1696
        %1698 = vrot.lane.b32.xlu0 %v1522, 24
        %v1699 = vpop.permute.xlu0 %1698
        %1700 = vrot.lane.b32.xlu0 %v1523, 24
        %v1701 = vpop.permute.xlu0 %1700
        %1702 = vrot.lane.b32.xlu0 %v1524, 24
        %v1703 = vpop.permute.xlu0 %1702
        %1704 = vrot.lane.b32.xlu0 %v1525, 24
        %v1705 = vpop.permute.xlu0 %1704
        %1706 = vrot.lane.b32.xlu0 %v1526, 24
        %v1707 = vpop.permute.xlu0 %1706
        %1708 = vrot.lane.b32.xlu0 %v1527, 24
        %v1709 = vpop.permute.xlu0 %1708
        %1710 = vrot.lane.b32.xlu0 %v1528, 24
        %v1711 = vpop.permute.xlu0 %1710
        %1712 = vrot.lane.b32.xlu0 %v1529, 24
        %v1713 = vpop.permute.xlu0 %1712
        %1714 = vrot.lane.b32.xlu0 %v1530, 24
        %v1715 = vpop.permute.xlu0 %1714
        %1716 = vrot.lane.b32.xlu0 %v1531, 24
        %v1717 = vpop.permute.xlu0 %1716
        %1718 = vrot.lane.b32.xlu0 %v1532, 24
        %v1719 = vpop.permute.xlu0 %1718
        %1720 = vrot.lane.b32.xlu0 %v1533, 24
        %v1721 = vpop.permute.xlu0 %1720
        %1722 = vrot.lane.b32.xlu0 %v1534, 24
        %v1723 = vpop.permute.xlu0 %1722
        %1724 = vrot.lane.b32.xlu0 %v1535, 24
        %v1725 = vpop.permute.xlu0 %1724
        %1726 = vrot.lane.b32.xlu0 %v1536, 24
        %v1727 = vpop.permute.xlu0 %1726
        %1728 = vrot.lane.b32.xlu0 %v1537, 24
        %v1729 = vpop.permute.xlu0 %1728
        %1730 = vrot.lane.b32.xlu0 %v1538, 24
        %v1731 = vpop.permute.xlu0 %1730
        %1732 = vrot.lane.b32.xlu0 %v1539, 24
        %v1733 = vpop.permute.xlu0 %1732
        %vm1766 = vcmask 97280
        %v1767 = vsel %vm1766, %v1504, %v1573
        %v1768 = vsel %vm1766, %v1505, %v1575
        %v1769 = vsel %vm1766, %v1506, %v1577
        %v1770 = vsel %vm1766, %v1507, %v1579
        %v1771 = vsel %vm1766, %v1508, %v1581
        %v1772 = vsel %vm1766, %v1509, %v1583
        %v1773 = vsel %vm1766, %v1510, %v1585
        %v1774 = vsel %vm1766, %v1511, %v1587
        %v1775 = vsel %vm1766, %v1512, %v1589
        %v1776 = vsel %vm1766, %v1513, %v1591
        %v1777 = vsel %vm1766, %v1514, %v1593
        %v1778 = vsel %vm1766, %v1515, %v1595
        %v1779 = vsel %vm1766, %v1516, %v1597
        %v1780 = vsel %vm1766, %v1517, %v1599
        %v1781 = vsel %vm1766, %v1518, %v1601
        %v1782 = vsel %vm1766, %v1519, %v1603
        %v1783 = vsel %vm1766, %v1520, %v1605
        %v1784 = vsel %vm1766, %v1521, %v1607
        %v1785 = vsel %vm1766, %v1522, %v1609
        %v1786 = vsel %vm1766, %v1523, %v1611
        %v1787 = vsel %vm1766, %v1524, %v1613
        %v1788 = vsel %vm1766, %v1525, %v1615
        %v1789 = vsel %vm1766, %v1526, %v1617
        %v1790 = vsel %vm1766, %v1527, %v1619
        %v1791 = vsel %vm1766, %v1528, %v1621
        %v1792 = vsel %vm1766, %v1529, %v1623
        %v1793 = vsel %vm1766, %v1530, %v1625
        %v1794 = vsel %vm1766, %v1531, %v1627
        %v1795 = vsel %vm1766, %v1532, %v1629
        %v1796 = vsel %vm1766, %v1533, %v1631
        %v1797 = vsel %vm1766, %v1534, %v1633
        %v1798 = vsel %vm1766, %v1535, %v1635
        %vm1799 = vcmask 195584
        %v1800 = vsel %vm1799, %v1767, %v1671
        %v1801 = vsel %vm1799, %v1768, %v1673
        %v1802 = vsel %vm1799, %v1769, %v1675
        %v1803 = vsel %vm1799, %v1770, %v1677
        %v1804 = vsel %vm1799, %v1771, %v1679
        %v1805 = vsel %vm1799, %v1772, %v1681
        %v1806 = vsel %vm1799, %v1773, %v1683
        %v1807 = vsel %vm1799, %v1774, %v1685
        %v1808 = vsel %vm1799, %v1775, %v1687
        %v1809 = vsel %vm1799, %v1776, %v1689
        %v1810 = vsel %vm1799, %v1777, %v1691
        %v1811 = vsel %vm1799, %v1778, %v1693
        %v1812 = vsel %vm1799, %v1779, %v1695
        %v1813 = vsel %vm1799, %v1780, %v1697
        %v1814 = vsel %vm1799, %v1781, %v1699
        %v1815 = vsel %vm1799, %v1782, %v1701
        %v1816 = vsel %vm1799, %v1783, %v1703
        %v1817 = vsel %vm1799, %v1784, %v1705
        %v1818 = vsel %vm1799, %v1785, %v1707
        %v1819 = vsel %vm1799, %v1786, %v1709
        %v1820 = vsel %vm1799, %v1787, %v1711
        %v1821 = vsel %vm1799, %v1788, %v1713
        %v1822 = vsel %vm1799, %v1789, %v1715
        %v1823 = vsel %vm1799, %v1790, %v1717
        %v1824 = vsel %vm1799, %v1791, %v1719
        %v1825 = vsel %vm1799, %v1792, %v1721
        %v1826 = vsel %vm1799, %v1793, %v1723
        %v1827 = vsel %vm1799, %v1794, %v1725
        %v1828 = vsel %vm1799, %v1795, %v1727
        %v1829 = vsel %vm1799, %v1796, %v1729
        %v1830 = vsel %vm1799, %v1797, %v1731
        %v1831 = vsel %vm1799, %v1798, %v1733
        %v1832 = vld [vmem:[%s4] sm:$0xff]
        %v1833 = vld [vmem:[%s4 + $0x8] sm:$0xff]
        %v1834 = vld [vmem:[%s4 + $0x10] sm:$0xff]
        %v1835 = vld [vmem:[%s4 + $0x18] sm:$0xff]
        %v1836 = vld [vmem:[%s4 + $0x20] sm:$0xf]
        %vm1837 = vcmask 293888
        %v1839 = vsel %vm1837, %v1800, 0
        %v1842 = vsel %vm1837, %v1801, 0
        %v1845 = vsel %vm1837, %v1802, 0
        %v1848 = vsel %vm1837, %v1803, 0
        %v1851 = vsel %vm1837, %v1804, 0
        %v1854 = vsel %vm1837, %v1805, 0
        %v1857 = vsel %vm1837, %v1806, 0
        %v1860 = vsel %vm1837, %v1807, 0
        %v1863 = vsel %vm1837, %v1808, 0
        %v1866 = vsel %vm1837, %v1809, 0
        %v1869 = vsel %vm1837, %v1810, 0
        %v1872 = vsel %vm1837, %v1811, 0
        %v1875 = vsel %vm1837, %v1812, 0
        %v1878 = vsel %vm1837, %v1813, 0
        %v1881 = vsel %vm1837, %v1814, 0
        %v1884 = vsel %vm1837, %v1815, 0
        %v1887 = vsel %vm1837, %v1816, 0
        %v1890 = vsel %vm1837, %v1817, 0
        %v1893 = vsel %vm1837, %v1818, 0
        %v1896 = vsel %vm1837, %v1819, 0
        %v1899 = vsel %vm1837, %v1820, 0
        %v1902 = vsel %vm1837, %v1821, 0
        %v1905 = vsel %vm1837, %v1822, 0
        %v1908 = vsel %vm1837, %v1823, 0
        %v1911 = vsel %vm1837, %v1824, 0
        %v1914 = vsel %vm1837, %v1825, 0
        %v1917 = vsel %vm1837, %v1826, 0
        %v1920 = vsel %vm1837, %v1827, 0
        %v1923 = vsel %vm1837, %v1828, 0
        %v1926 = vsel %vm1837, %v1829, 0
        %v1929 = vsel %vm1837, %v1830, 0
        %v1932 = vsel %vm1837, %v1831, 0
        %vm1934 = vcmask 1043456
        %v1936 = vsel %vm1934, %v1836, 0
        %1938 = vmatpush.msra.mxu0 0.0
        %1939 = vmatpush.msra.mxu0 0.0
        %1940 = vmatpush.msra.mxu0 0.0
        %1941 = vmatpush.msra.mxu0 0.0
        %1942 = vmatpush.msra.mxu0 0.0
        %1943 = vmatpush.msra.mxu0 0.0
        %1944 = vmatpush.msra.mxu0 0.0
        %1945 = vmatpush.msra.mxu0 0.0
        %1946 = vmatpush.msra.mxu0 0.0
        %1947 = vmatpush.msra.mxu0 0.0
        %1948 = vmatpush.msra.mxu0 0.0
        %1949 = vmatpush.msra.mxu0 %v1936
        %1950 = vmatpush.msra.mxu0 %v1835
        %1951 = vmatpush.msra.mxu0 %v1834
        %1952 = vmatpush.msra.mxu0 %v1833
        %1953 = vmatpush.msra.mxu0 %v1832
        %1954 = vmatmul.f32.gmra.mxu0 %v1839
        %v1955 = vpop.f32.mrf.mxu0
        %v1956 = vadd.f32 0.0, %v1955
        %1957 = vmatmul.f32.gmra.mxu0 %v1842
        %v1958 = vpop.f32.mrf.mxu0
        %v1959 = vadd.f32 0.0, %v1958
        %1960 = vmatmul.f32.gmra.mxu0 %v1845
        %v1961 = vpop.f32.mrf.mxu0
        %v1962 = vadd.f32 0.0, %v1961
        %1963 = vmatmul.f32.gmra.mxu0 %v1848
        %v1964 = vpop.f32.mrf.mxu0
        %v1965 = vadd.f32 0.0, %v1964
        %1966 = vmatmul.f32.gmra.mxu0 %v1851
        %v1967 = vpop.f32.mrf.mxu0
        %v1968 = vadd.f32 0.0, %v1967
        %1969 = vmatmul.f32.gmra.mxu0 %v1854
        %v1970 = vpop.f32.mrf.mxu0
        %v1971 = vadd.f32 0.0, %v1970
        %1972 = vmatmul.f32.gmra.mxu0 %v1857
        %v1973 = vpop.f32.mrf.mxu0
        %v1974 = vadd.f32 0.0, %v1973
        %1975 = vmatmul.f32.gmra.mxu0 %v1860
        %v1976 = vpop.f32.mrf.mxu0
        %v1977 = vadd.f32 0.0, %v1976
        %1978 = vmatmul.f32.gmra.mxu0 %v1863
        %v1979 = vpop.f32.mrf.mxu0
        %v1980 = vadd.f32 0.0, %v1979
        %1981 = vmatmul.f32.gmra.mxu0 %v1866
        %v1982 = vpop.f32.mrf.mxu0
        %v1983 = vadd.f32 0.0, %v1982
        %1984 = vmatmul.f32.gmra.mxu0 %v1869
        %v1985 = vpop.f32.mrf.mxu0
        %v1986 = vadd.f32 0.0, %v1985
        %1987 = vmatmul.f32.gmra.mxu0 %v1872
        %v1988 = vpop.f32.mrf.mxu0
        %v1989 = vadd.f32 0.0, %v1988
        %1990 = vmatmul.f32.gmra.mxu0 %v1875
        %v1991 = vpop.f32.mrf.mxu0
        %v1992 = vadd.f32 0.0, %v1991
        %1993 = vmatmul.f32.gmra.mxu0 %v1878
        %v1994 = vpop.f32.mrf.mxu0
        %v1995 = vadd.f32 0.0, %v1994
        %1996 = vmatmul.f32.gmra.mxu0 %v1881
        %v1997 = vpop.f32.mrf.mxu0
        %v1998 = vadd.f32 0.0, %v1997
        %1999 = vmatmul.f32.gmra.mxu0 %v1884
        %v2000 = vpop.f32.mrf.mxu0
        %v2001 = vadd.f32 0.0, %v2000
        %2002 = vmatmul.f32.gmra.mxu0 %v1887
        %v2003 = vpop.f32.mrf.mxu0
        %v2004 = vadd.f32 0.0, %v2003
        %2005 = vmatmul.f32.gmra.mxu0 %v1890
        %v2006 = vpop.f32.mrf.mxu0
        %v2007 = vadd.f32 0.0, %v2006
        %2008 = vmatmul.f32.gmra.mxu0 %v1893
        %v2009 = vpop.f32.mrf.mxu0
        %v2010 = vadd.f32 0.0, %v2009
        %2011 = vmatmul.f32.gmra.mxu0 %v1896
        %v2012 = vpop.f32.mrf.mxu0
        %v2013 = vadd.f32 0.0, %v2012
        %2014 = vmatmul.f32.gmra.mxu0 %v1899
        %v2015 = vpop.f32.mrf.mxu0
        %v2016 = vadd.f32 0.0, %v2015
        %2017 = vmatmul.f32.gmra.mxu0 %v1902
        %v2018 = vpop.f32.mrf.mxu0
        %v2019 = vadd.f32 0.0, %v2018
        %2020 = vmatmul.f32.gmra.mxu0 %v1905
        %v2021 = vpop.f32.mrf.mxu0
        %v2022 = vadd.f32 0.0, %v2021
        %2023 = vmatmul.f32.gmra.mxu0 %v1908
        %v2024 = vpop.f32.mrf.mxu0
        %v2025 = vadd.f32 0.0, %v2024
        %2026 = vmatmul.f32.gmra.mxu0 %v1911
        %v2027 = vpop.f32.mrf.mxu0
        %v2028 = vadd.f32 0.0, %v2027
        %2029 = vmatmul.f32.gmra.mxu0 %v1914
        %v2030 = vpop.f32.mrf.mxu0
        %v2031 = vadd.f32 0.0, %v2030
        %2032 = vmatmul.f32.gmra.mxu0 %v1917
        %v2033 = vpop.f32.mrf.mxu0
        %v2034 = vadd.f32 0.0, %v2033
        %2035 = vmatmul.f32.gmra.mxu0 %v1920
        %v2036 = vpop.f32.mrf.mxu0
        %v2037 = vadd.f32 0.0, %v2036
        %2038 = vmatmul.f32.gmra.mxu0 %v1923
        %v2039 = vpop.f32.mrf.mxu0
        %v2040 = vadd.f32 0.0, %v2039
        %2041 = vmatmul.f32.gmra.mxu0 %v1926
        %v2042 = vpop.f32.mrf.mxu0
        %v2043 = vadd.f32 0.0, %v2042
        %2044 = vmatmul.f32.gmra.mxu0 %v1929
        %v2045 = vpop.f32.mrf.mxu0
        %v2046 = vadd.f32 0.0, %v2045
        %2047 = vmatmul.f32.gmra.mxu0 %v1932
        %v2048 = vpop.f32.mrf.mxu0
        %v2049 = vadd.f32 0.0, %v2048
        %2050 = vdwg.mxu0
        %v2051 = vld [vmem:[%s5] sm:$0x1]
        %v2053 = vperm.slane %v2051, 0
        %v2055 = vmul.f32 %v1956, %v2053
        %v2056 = vmul.f32 %v1959, %v2053
        %v2057 = vmul.f32 %v1962, %v2053
        %v2058 = vmul.f32 %v1965, %v2053
        %v2059 = vmul.f32 %v1968, %v2053
        %v2060 = vmul.f32 %v1971, %v2053
        %v2061 = vmul.f32 %v1974, %v2053
        %v2062 = vmul.f32 %v1977, %v2053
        %v2063 = vmul.f32 %v1980, %v2053
        %v2064 = vmul.f32 %v1983, %v2053
        %v2065 = vmul.f32 %v1986, %v2053
        %v2066 = vmul.f32 %v1989, %v2053
        %v2067 = vmul.f32 %v1992, %v2053
        %v2068 = vmul.f32 %v1995, %v2053
        %v2069 = vmul.f32 %v1998, %v2053
        %v2070 = vmul.f32 %v2001, %v2053
        %v2071 = vmul.f32 %v2004, %v2053
        %v2072 = vmul.f32 %v2007, %v2053
        %v2073 = vmul.f32 %v2010, %v2053
        %v2074 = vmul.f32 %v2013, %v2053
        %v2075 = vmul.f32 %v2016, %v2053
        %v2076 = vmul.f32 %v2019, %v2053
        %v2077 = vmul.f32 %v2022, %v2053
        %v2078 = vmul.f32 %v2025, %v2053
        %v2079 = vmul.f32 %v2028, %v2053
        %v2080 = vmul.f32 %v2031, %v2053
        %v2081 = vmul.f32 %v2034, %v2053
        %v2082 = vmul.f32 %v2037, %v2053
        %v2083 = vmul.f32 %v2040, %v2053
        %v2084 = vmul.f32 %v2043, %v2053
        %v2085 = vmul.f32 %v2046, %v2053
        %v2086 = vmul.f32 %v2049, %v2053
        %v2087 = vld [vmem:[%s6] sm:$0x1]
        %v2089 = vperm.slane %v2087, 0
        %v2091 = vadd.f32 %v2055, %v2089
        %v2092 = vadd.f32 %v2056, %v2089
        %v2093 = vadd.f32 %v2057, %v2089
        %v2094 = vadd.f32 %v2058, %v2089
        %v2095 = vadd.f32 %v2059, %v2089
        %v2096 = vadd.f32 %v2060, %v2089
        %v2097 = vadd.f32 %v2061, %v2089
        %v2098 = vadd.f32 %v2062, %v2089
        %v2099 = vadd.f32 %v2063, %v2089
        %v2100 = vadd.f32 %v2064, %v2089
        %v2101 = vadd.f32 %v2065, %v2089
        %v2102 = vadd.f32 %v2066, %v2089
        %v2103 = vadd.f32 %v2067, %v2089
        %v2104 = vadd.f32 %v2068, %v2089
        %v2105 = vadd.f32 %v2069, %v2089
        %v2106 = vadd.f32 %v2070, %v2089
        %v2107 = vadd.f32 %v2071, %v2089
        %v2108 = vadd.f32 %v2072, %v2089
        %v2109 = vadd.f32 %v2073, %v2089
        %v2110 = vadd.f32 %v2074, %v2089
        %v2111 = vadd.f32 %v2075, %v2089
        %v2112 = vadd.f32 %v2076, %v2089
        %v2113 = vadd.f32 %v2077, %v2089
        %v2114 = vadd.f32 %v2078, %v2089
        %v2115 = vadd.f32 %v2079, %v2089
        %v2116 = vadd.f32 %v2080, %v2089
        %v2117 = vadd.f32 %v2081, %v2089
        %v2118 = vadd.f32 %v2082, %v2089
        %v2119 = vadd.f32 %v2083, %v2089
        %v2120 = vadd.f32 %v2084, %v2089
        %v2121 = vadd.f32 %v2085, %v2089
        %v2122 = vadd.f32 %v2086, %v2089
        %v2123 = vmax.f32 %v2091, 0.0
        %v2124 = vmax.f32 %v2092, 0.0
        %v2125 = vmax.f32 %v2093, 0.0
        %v2126 = vmax.f32 %v2094, 0.0
        %v2127 = vmax.f32 %v2095, 0.0
        %v2128 = vmax.f32 %v2096, 0.0
        %v2129 = vmax.f32 %v2097, 0.0
        %v2130 = vmax.f32 %v2098, 0.0
        %v2131 = vmax.f32 %v2099, 0.0
        %v2132 = vmax.f32 %v2100, 0.0
        %v2133 = vmax.f32 %v2101, 0.0
        %v2134 = vmax.f32 %v2102, 0.0
        %v2135 = vmax.f32 %v2103, 0.0
        %v2136 = vmax.f32 %v2104, 0.0
        %v2137 = vmax.f32 %v2105, 0.0
        %v2138 = vmax.f32 %v2106, 0.0
        %v2139 = vmax.f32 %v2107, 0.0
        %v2140 = vmax.f32 %v2108, 0.0
        %v2141 = vmax.f32 %v2109, 0.0
        %v2142 = vmax.f32 %v2110, 0.0
        %v2143 = vmax.f32 %v2111, 0.0
        %v2144 = vmax.f32 %v2112, 0.0
        %v2145 = vmax.f32 %v2113, 0.0
        %v2146 = vmax.f32 %v2114, 0.0
        %v2147 = vmax.f32 %v2115, 0.0
        %v2148 = vmax.f32 %v2116, 0.0
        %v2149 = vmax.f32 %v2117, 0.0
        %v2150 = vmax.f32 %v2118, 0.0
        %v2151 = vmax.f32 %v2119, 0.0
        %v2152 = vmax.f32 %v2120, 0.0
        %v2153 = vmax.f32 %v2121, 0.0
        %v2154 = vmax.f32 %v2122, 0.0
        %v2155 = vld [vmem:[%s7] sm:$0xf]
        %v2157 = vsel %vm1466, %v2123, 0
        %v2160 = vsel %vm1466, %v2124, 0
        %v2163 = vsel %vm1466, %v2125, 0
        %v2166 = vsel %vm1466, %v2126, 0
        %v2169 = vsel %vm1466, %v2127, 0
        %v2172 = vsel %vm1466, %v2128, 0
        %v2175 = vsel %vm1466, %v2129, 0
        %v2178 = vsel %vm1466, %v2130, 0
        %v2181 = vsel %vm1466, %v2131, 0
        %v2184 = vsel %vm1466, %v2132, 0
        %v2187 = vsel %vm1466, %v2133, 0
        %v2190 = vsel %vm1466, %v2134, 0
        %v2193 = vsel %vm1466, %v2135, 0
        %v2196 = vsel %vm1466, %v2136, 0
        %v2199 = vsel %vm1466, %v2137, 0
        %v2202 = vsel %vm1466, %v2138, 0
        %v2205 = vsel %vm1466, %v2139, 0
        %v2208 = vsel %vm1466, %v2140, 0
        %v2211 = vsel %vm1466, %v2141, 0
        %v2214 = vsel %vm1466, %v2142, 0
        %v2217 = vsel %vm1466, %v2143, 0
        %v2220 = vsel %vm1466, %v2144, 0
        %v2223 = vsel %vm1466, %v2145, 0
        %v2226 = vsel %vm1466, %v2146, 0
        %v2229 = vsel %vm1466, %v2147, 0
        %v2232 = vsel %vm1466, %v2148, 0
        %v2235 = vsel %vm1466, %v2149, 0
        %v2238 = vsel %vm1466, %v2150, 0
        %v2241 = vsel %vm1466, %v2151, 0
        %v2244 = vsel %vm1466, %v2152, 0
        %v2247 = vsel %vm1466, %v2153, 0
        %v2250 = vsel %vm1466, %v2154, 0
        %v2253 = vsel %vm1934, %v2155, 0
        %2255 = vmatpush.msra.mxu0 0.0
        %2256 = vmatpush.msra.mxu0 0.0
        %2257 = vmatpush.msra.mxu0 0.0
        %2258 = vmatpush.msra.mxu0 0.0
        %2259 = vmatpush.msra.mxu0 0.0
        %2260 = vmatpush.msra.mxu0 0.0
        %2261 = vmatpush.msra.mxu0 0.0
        %2262 = vmatpush.msra.mxu0 0.0
        %2263 = vmatpush.msra.mxu0 0.0
        %2264 = vmatpush.msra.mxu0 0.0
        %2265 = vmatpush.msra.mxu0 0.0
        %2266 = vmatpush.msra.mxu0 0.0
        %2267 = vmatpush.msra.mxu0 0.0
        %2268 = vmatpush.msra.mxu0 0.0
        %2269 = vmatpush.msra.mxu0 0.0
        %2270 = vmatpush.msra.mxu0 %v2253
        %2271 = vmatmul.f32.gmra.mxu0 %v2157
        %v2272 = vpop.f32.mrf.mxu0
        %v2273 = vadd.f32 0.0, %v2272
        %2274 = vmatmul.f32.gmra.mxu0 %v2160
        %v2275 = vpop.f32.mrf.mxu0
        %v2276 = vadd.f32 0.0, %v2275
        %2277 = vmatmul.f32.gmra.mxu0 %v2163
        %v2278 = vpop.f32.mrf.mxu0
        %v2279 = vadd.f32 0.0, %v2278
        %2280 = vmatmul.f32.gmra.mxu0 %v2166
        %v2281 = vpop.f32.mrf.mxu0
        %v2282 = vadd.f32 0.0, %v2281
        %2283 = vmatmul.f32.gmra.mxu0 %v2169
        %v2284 = vpop.f32.mrf.mxu0
        %v2285 = vadd.f32 0.0, %v2284
        %2286 = vmatmul.f32.gmra.mxu0 %v2172
        %v2287 = vpop.f32.mrf.mxu0
        %v2288 = vadd.f32 0.0, %v2287
        %2289 = vmatmul.f32.gmra.mxu0 %v2175
        %v2290 = vpop.f32.mrf.mxu0
        %v2291 = vadd.f32 0.0, %v2290
        %2292 = vmatmul.f32.gmra.mxu0 %v2178
        %v2293 = vpop.f32.mrf.mxu0
        %v2294 = vadd.f32 0.0, %v2293
        %2295 = vmatmul.f32.gmra.mxu0 %v2181
        %v2296 = vpop.f32.mrf.mxu0
        %v2297 = vadd.f32 0.0, %v2296
        %2298 = vmatmul.f32.gmra.mxu0 %v2184
        %v2299 = vpop.f32.mrf.mxu0
        %v2300 = vadd.f32 0.0, %v2299
        %2301 = vmatmul.f32.gmra.mxu0 %v2187
        %v2302 = vpop.f32.mrf.mxu0
        %v2303 = vadd.f32 0.0, %v2302
        %2304 = vmatmul.f32.gmra.mxu0 %v2190
        %v2305 = vpop.f32.mrf.mxu0
        %v2306 = vadd.f32 0.0, %v2305
        %2307 = vmatmul.f32.gmra.mxu0 %v2193
        %v2308 = vpop.f32.mrf.mxu0
        %v2309 = vadd.f32 0.0, %v2308
        %2310 = vmatmul.f32.gmra.mxu0 %v2196
        %v2311 = vpop.f32.mrf.mxu0
        %v2312 = vadd.f32 0.0, %v2311
        %2313 = vmatmul.f32.gmra.mxu0 %v2199
        %v2314 = vpop.f32.mrf.mxu0
        %v2315 = vadd.f32 0.0, %v2314
        %2316 = vmatmul.f32.gmra.mxu0 %v2202
        %v2317 = vpop.f32.mrf.mxu0
        %v2318 = vadd.f32 0.0, %v2317
        %2319 = vmatmul.f32.gmra.mxu0 %v2205
        %v2320 = vpop.f32.mrf.mxu0
        %v2321 = vadd.f32 0.0, %v2320
        %2322 = vmatmul.f32.gmra.mxu0 %v2208
        %v2323 = vpop.f32.mrf.mxu0
        %v2324 = vadd.f32 0.0, %v2323
        %2325 = vmatmul.f32.gmra.mxu0 %v2211
        %v2326 = vpop.f32.mrf.mxu0
        %v2327 = vadd.f32 0.0, %v2326
        %2328 = vmatmul.f32.gmra.mxu0 %v2214
        %v2329 = vpop.f32.mrf.mxu0
        %v2330 = vadd.f32 0.0, %v2329
        %2331 = vmatmul.f32.gmra.mxu0 %v2217
        %v2332 = vpop.f32.mrf.mxu0
        %v2333 = vadd.f32 0.0, %v2332
        %2334 = vmatmul.f32.gmra.mxu0 %v2220
        %v2335 = vpop.f32.mrf.mxu0
        %v2336 = vadd.f32 0.0, %v2335
        %2337 = vmatmul.f32.gmra.mxu0 %v2223
        %v2338 = vpop.f32.mrf.mxu0
        %v2339 = vadd.f32 0.0, %v2338
        %2340 = vmatmul.f32.gmra.mxu0 %v2226
        %v2341 = vpop.f32.mrf.mxu0
        %v2342 = vadd.f32 0.0, %v2341
        %2343 = vmatmul.f32.gmra.mxu0 %v2229
        %v2344 = vpop.f32.mrf.mxu0
        %v2345 = vadd.f32 0.0, %v2344
        %2346 = vmatmul.f32.gmra.mxu0 %v2232
        %v2347 = vpop.f32.mrf.mxu0
        %v2348 = vadd.f32 0.0, %v2347
        %2349 = vmatmul.f32.gmra.mxu0 %v2235
        %v2350 = vpop.f32.mrf.mxu0
        %v2351 = vadd.f32 0.0, %v2350
        %2352 = vmatmul.f32.gmra.mxu0 %v2238
        %v2353 = vpop.f32.mrf.mxu0
        %v2354 = vadd.f32 0.0, %v2353
        %2355 = vmatmul.f32.gmra.mxu0 %v2241
        %v2356 = vpop.f32.mrf.mxu0
        %v2357 = vadd.f32 0.0, %v2356
        %2358 = vmatmul.f32.gmra.mxu0 %v2244
        %v2359 = vpop.f32.mrf.mxu0
        %v2360 = vadd.f32 0.0, %v2359
        %2361 = vmatmul.f32.gmra.mxu0 %v2247
        %v2362 = vpop.f32.mrf.mxu0
        %v2363 = vadd.f32 0.0, %v2362
        %2364 = vmatmul.f32.gmra.mxu0 %v2250
        %v2365 = vpop.f32.mrf.mxu0
        %v2366 = vadd.f32 0.0, %v2365
        %2367 = vdwg.mxu0
        %v2368 = vld [vmem:[%s8] sm:$0x1]
        %v2370 = vperm.slane %v2368, 0
        %v2372 = vmul.f32 %v2273, %v2370
        %v2373 = vmul.f32 %v2276, %v2370
        %v2374 = vmul.f32 %v2279, %v2370
        %v2375 = vmul.f32 %v2282, %v2370
        %v2376 = vmul.f32 %v2285, %v2370
        %v2377 = vmul.f32 %v2288, %v2370
        %v2378 = vmul.f32 %v2291, %v2370
        %v2379 = vmul.f32 %v2294, %v2370
        %v2380 = vmul.f32 %v2297, %v2370
        %v2381 = vmul.f32 %v2300, %v2370
        %v2382 = vmul.f32 %v2303, %v2370
        %v2383 = vmul.f32 %v2306, %v2370
        %v2384 = vmul.f32 %v2309, %v2370
        %v2385 = vmul.f32 %v2312, %v2370
        %v2386 = vmul.f32 %v2315, %v2370
        %v2387 = vmul.f32 %v2318, %v2370
        %v2388 = vmul.f32 %v2321, %v2370
        %v2389 = vmul.f32 %v2324, %v2370
        %v2390 = vmul.f32 %v2327, %v2370
        %v2391 = vmul.f32 %v2330, %v2370
        %v2392 = vmul.f32 %v2333, %v2370
        %v2393 = vmul.f32 %v2336, %v2370
        %v2394 = vmul.f32 %v2339, %v2370
        %v2395 = vmul.f32 %v2342, %v2370
        %v2396 = vmul.f32 %v2345, %v2370
        %v2397 = vmul.f32 %v2348, %v2370
        %v2398 = vmul.f32 %v2351, %v2370
        %v2399 = vmul.f32 %v2354, %v2370
        %v2400 = vmul.f32 %v2357, %v2370
        %v2401 = vmul.f32 %v2360, %v2370
        %v2402 = vmul.f32 %v2363, %v2370
        %v2403 = vmul.f32 %v2366, %v2370
        %v2404 = vld [vmem:[%s9] sm:$0x1]
        %v2406 = vperm.slane %v2404, 0
        %v2408 = vadd.f32 %v2372, %v2406
        %v2409 = vadd.f32 %v2373, %v2406
        %v2410 = vadd.f32 %v2374, %v2406
        %v2411 = vadd.f32 %v2375, %v2406
        %v2412 = vadd.f32 %v2376, %v2406
        %v2413 = vadd.f32 %v2377, %v2406
        %v2414 = vadd.f32 %v2378, %v2406
        %v2415 = vadd.f32 %v2379, %v2406
        %v2416 = vadd.f32 %v2380, %v2406
        %v2417 = vadd.f32 %v2381, %v2406
        %v2418 = vadd.f32 %v2382, %v2406
        %v2419 = vadd.f32 %v2383, %v2406
        %v2420 = vadd.f32 %v2384, %v2406
        %v2421 = vadd.f32 %v2385, %v2406
        %v2422 = vadd.f32 %v2386, %v2406
        %v2423 = vadd.f32 %v2387, %v2406
        %v2424 = vadd.f32 %v2388, %v2406
        %v2425 = vadd.f32 %v2389, %v2406
        %v2426 = vadd.f32 %v2390, %v2406
        %v2427 = vadd.f32 %v2391, %v2406
        %v2428 = vadd.f32 %v2392, %v2406
        %v2429 = vadd.f32 %v2393, %v2406
        %v2430 = vadd.f32 %v2394, %v2406
        %v2431 = vadd.f32 %v2395, %v2406
        %v2432 = vadd.f32 %v2396, %v2406
        %v2433 = vadd.f32 %v2397, %v2406
        %v2434 = vadd.f32 %v2398, %v2406
        %v2435 = vadd.f32 %v2399, %v2406
        %v2436 = vadd.f32 %v2400, %v2406
        %v2437 = vadd.f32 %v2401, %v2406
        %v2438 = vadd.f32 %v2402, %v2406
        %v2439 = vadd.f32 %v2403, %v2406
        %v2440 = vrot.slane %v361, 1
        %v2441 = vrot.slane %v362, 1
        %v2442 = vsel %vm1068, %v2440, %v2441
        %v2443 = vrot.slane %v363, 1
        %v2444 = vsel %vm1068, %v2441, %v2443
        %v2445 = vrot.slane %v364, 1
        %v2446 = vrot.slane %v365, 1
        %v2447 = vsel %vm1068, %v2445, %v2446
        %v2448 = vrot.slane %v366, 1
        %v2449 = vsel %vm1068, %v2446, %v2448
        %v2450 = vrot.slane %v367, 1
        %v2451 = vrot.slane %v368, 1
        %v2452 = vsel %vm1068, %v2450, %v2451
        %v2453 = vrot.slane %v369, 1
        %v2454 = vsel %vm1068, %v2451, %v2453
        %v2455 = vrot.slane %v370, 1
        %v2456 = vrot.slane %v371, 1
        %v2457 = vsel %vm1068, %v2455, %v2456
        %v2458 = vrot.slane %v372, 1
        %v2459 = vsel %vm1068, %v2456, %v2458
        %v2460 = vrot.slane %v373, 1
        %v2461 = vrot.slane %v374, 1
        %v2462 = vsel %vm1068, %v2460, %v2461
        %v2463 = vrot.slane %v375, 1
        %v2464 = vsel %vm1068, %v2461, %v2463
        %v2465 = vrot.slane %v376, 1
        %v2466 = vrot.slane %v377, 1
        %v2467 = vsel %vm1068, %v2465, %v2466
        %v2468 = vrot.slane %v378, 1
        %v2469 = vsel %vm1068, %v2466, %v2468
        %v2470 = vrot.slane %v379, 1
        %v2471 = vrot.slane %v380, 1
        %v2472 = vsel %vm1068, %v2470, %v2471
        %v2473 = vrot.slane %v381, 1
        %v2474 = vsel %vm1068, %v2471, %v2473
        %v2475 = vrot.slane %v382, 1
        %v2476 = vrot.slane %v383, 1
        %v2477 = vsel %vm1068, %v2475, %v2476
        %v2478 = vrot.slane %v384, 1
        %v2479 = vsel %vm1068, %v2476, %v2478
        %v2480 = vrot.slane %v385, 1
        %v2481 = vrot.slane %v386, 1
        %v2482 = vsel %vm1068, %v2480, %v2481
        %v2483 = vrot.slane %v387, 1
        %v2484 = vsel %vm1068, %v2481, %v2483
        %v2485 = vrot.slane %v388, 1
        %v2486 = vrot.slane %v389, 1
        %v2487 = vsel %vm1068, %v2485, %v2486
        %v2488 = vrot.slane %v390, 1
        %v2489 = vsel %vm1068, %v2486, %v2488
        %v2490 = vrot.slane %v391, 1
        %v2491 = vrot.slane %v392, 1
        %v2492 = vsel %vm1068, %v2490, %v2491
        %v2493 = vrot.slane %v393, 1
        %v2494 = vsel %vm1068, %v2491, %v2493
        %v2495 = vrot.slane %v394, 1
        %v2496 = vrot.slane %v395, 1
        %v2497 = vsel %vm1068, %v2495, %v2496
        %v2498 = vrot.slane %v396, 1
        %v2499 = vsel %vm1068, %v2496, %v2498
        %v2500 = vrot.slane %v397, 1
        %v2501 = vrot.slane %v398, 1
        %v2502 = vsel %vm1068, %v2500, %v2501
        %v2503 = vrot.slane %v399, 1
        %v2504 = vsel %vm1068, %v2501, %v2503
        %v2505 = vrot.slane %v400, 1
        %v2506 = vrot.slane %v401, 1
        %v2507 = vsel %vm1068, %v2505, %v2506
        %v2508 = vrot.slane %v402, 1
        %v2509 = vsel %vm1068, %v2506, %v2508
        %v2510 = vrot.slane %v403, 1
        %v2511 = vrot.slane %v404, 1
        %v2512 = vsel %vm1068, %v2510, %v2511
        %v2513 = vrot.slane %v405, 1
        %v2514 = vsel %vm1068, %v2511, %v2513
        %v2515 = vrot.slane %v406, 1
        %v2516 = vrot.slane %v407, 1
        %v2517 = vsel %vm1068, %v2515, %v2516
        %v2518 = vrot.slane %v408, 1
        %v2519 = vsel %vm1068, %v2516, %v2518
        %v2552 = vadd.f32 %v2408, %v2442
        %v2553 = vadd.f32 %v2409, %v2444
        %v2554 = vadd.f32 %v2410, %v2447
        %v2555 = vadd.f32 %v2411, %v2449
        %v2556 = vadd.f32 %v2412, %v2452
        %v2557 = vadd.f32 %v2413, %v2454
        %v2558 = vadd.f32 %v2414, %v2457
        %v2559 = vadd.f32 %v2415, %v2459
        %v2560 = vadd.f32 %v2416, %v2462
        %v2561 = vadd.f32 %v2417, %v2464
        %v2562 = vadd.f32 %v2418, %v2467
        %v2563 = vadd.f32 %v2419, %v2469
        %v2564 = vadd.f32 %v2420, %v2472
        %v2565 = vadd.f32 %v2421, %v2474
        %v2566 = vadd.f32 %v2422, %v2477
        %v2567 = vadd.f32 %v2423, %v2479
        %v2568 = vadd.f32 %v2424, %v2482
        %v2569 = vadd.f32 %v2425, %v2484
        %v2570 = vadd.f32 %v2426, %v2487
        %v2571 = vadd.f32 %v2427, %v2489
        %v2572 = vadd.f32 %v2428, %v2492
        %v2573 = vadd.f32 %v2429, %v2494
        %v2574 = vadd.f32 %v2430, %v2497
        %v2575 = vadd.f32 %v2431, %v2499
        %v2576 = vadd.f32 %v2432, %v2502
        %v2577 = vadd.f32 %v2433, %v2504
        %v2578 = vadd.f32 %v2434, %v2507
        %v2579 = vadd.f32 %v2435, %v2509
        %v2580 = vadd.f32 %v2436, %v2512
        %v2581 = vadd.f32 %v2437, %v2514
        %v2582 = vadd.f32 %v2438, %v2517
        %v2583 = vadd.f32 %v2439, %v2519
        %v2584 = vmax.f32 %v2552, 0.0
        %v2585 = vmax.f32 %v2553, 0.0
        %v2586 = vmax.f32 %v2554, 0.0
        %v2587 = vmax.f32 %v2555, 0.0
        %v2588 = vmax.f32 %v2556, 0.0
        %v2589 = vmax.f32 %v2557, 0.0
        %v2590 = vmax.f32 %v2558, 0.0
        %v2591 = vmax.f32 %v2559, 0.0
        %v2592 = vmax.f32 %v2560, 0.0
        %v2593 = vmax.f32 %v2561, 0.0
        %v2594 = vmax.f32 %v2562, 0.0
        %v2595 = vmax.f32 %v2563, 0.0
        %v2596 = vmax.f32 %v2564, 0.0
        %v2597 = vmax.f32 %v2565, 0.0
        %v2598 = vmax.f32 %v2566, 0.0
        %v2599 = vmax.f32 %v2567, 0.0
        %v2600 = vmax.f32 %v2568, 0.0
        %v2601 = vmax.f32 %v2569, 0.0
        %v2602 = vmax.f32 %v2570, 0.0
        %v2603 = vmax.f32 %v2571, 0.0
        %v2604 = vmax.f32 %v2572, 0.0
        %v2605 = vmax.f32 %v2573, 0.0
        %v2606 = vmax.f32 %v2574, 0.0
        %v2607 = vmax.f32 %v2575, 0.0
        %v2608 = vmax.f32 %v2576, 0.0
        %v2609 = vmax.f32 %v2577, 0.0
        %v2610 = vmax.f32 %v2578, 0.0
        %v2611 = vmax.f32 %v2579, 0.0
        %v2612 = vmax.f32 %v2580, 0.0
        %v2613 = vmax.f32 %v2581, 0.0
        %v2614 = vmax.f32 %v2582, 0.0
        %v2615 = vmax.f32 %v2583, 0.0
        %2616 = vst.msk [vmem:[%s352] sm:$0xff] %vm414, %v2584
        %2617 = vst.msk [vmem:[%s352 + $0x8] sm:$0xff] %vm414, %v2585
        %2618 = vst.msk [vmem:[%s352 + $0x10] sm:$0xff] %vm414, %v2586
        %2619 = vst.msk [vmem:[%s352 + $0x18] sm:$0xff] %vm414, %v2587
        %2620 = vst.msk [vmem:[%s352 + $0x20] sm:$0xff] %vm414, %v2588
        %2621 = vst.msk [vmem:[%s352 + $0x28] sm:$0xff] %vm414, %v2589
        %2622 = vst.msk [vmem:[%s352 + $0x30] sm:$0xff] %vm414, %v2590
        %2623 = vst.msk [vmem:[%s352 + $0x38] sm:$0xff] %vm414, %v2591
        %2624 = vst.msk [vmem:[%s352 + $0x40] sm:$0xff] %vm414, %v2592
        %2625 = vst.msk [vmem:[%s352 + $0x48] sm:$0xff] %vm414, %v2593
        %2626 = vst.msk [vmem:[%s352 + $0x50] sm:$0xff] %vm414, %v2594
        %2627 = vst.msk [vmem:[%s352 + $0x58] sm:$0xff] %vm414, %v2595
        %2628 = vst.msk [vmem:[%s352 + $0x60] sm:$0xff] %vm414, %v2596
        %2629 = vst.msk [vmem:[%s352 + $0x68] sm:$0xff] %vm414, %v2597
        %2630 = vst.msk [vmem:[%s352 + $0x70] sm:$0xff] %vm414, %v2598
        %2631 = vst.msk [vmem:[%s352 + $0x78] sm:$0xff] %vm414, %v2599
        %2632 = vst.msk [vmem:[%s352 + $0x80] sm:$0xff] %vm414, %v2600
        %2633 = vst.msk [vmem:[%s352 + $0x88] sm:$0xff] %vm414, %v2601
        %2634 = vst.msk [vmem:[%s352 + $0x90] sm:$0xff] %vm414, %v2602
        %2635 = vst.msk [vmem:[%s352 + $0x98] sm:$0xff] %vm414, %v2603
        %2636 = vst.msk [vmem:[%s352 + $0xa0] sm:$0xff] %vm414, %v2604
        %2637 = vst.msk [vmem:[%s352 + $0xa8] sm:$0xff] %vm414, %v2605
        %2638 = vst.msk [vmem:[%s352 + $0xb0] sm:$0xff] %vm414, %v2606
        %2639 = vst.msk [vmem:[%s352 + $0xb8] sm:$0xff] %vm414, %v2607
        %2640 = vst.msk [vmem:[%s352 + $0xc0] sm:$0xff] %vm414, %v2608
        %2641 = vst.msk [vmem:[%s352 + $0xc8] sm:$0xff] %vm414, %v2609
        %2642 = vst.msk [vmem:[%s352 + $0xd0] sm:$0xff] %vm414, %v2610
        %2643 = vst.msk [vmem:[%s352 + $0xd8] sm:$0xff] %vm414, %v2611
        %2644 = vst.msk [vmem:[%s352 + $0xe0] sm:$0xff] %vm414, %v2612
        %2645 = vst.msk [vmem:[%s352 + $0xe8] sm:$0xff] %vm414, %v2613
        %2646 = vst.msk [vmem:[%s352 + $0xf0] sm:$0xff] %vm414, %v2614
        %2647 = vst.msk [vmem:[%s352 + $0xf8] sm:$0xff] %vm414, %v2615
        %s2648 = sand.u32 %s247, 1
        %s2649 = scalar_lea.sflag [#allocation3], %s2648
        %s2650 = sand.u32 %s247, 1
        %s2651 = smul.addr %s2650, 256
        %s2652 = scalar_lea.vmem [#allocation2], %s2651
        // Predicated region
        $region61: #{tpu_custom_call.1} parent=59 // pred_check
          %p2653 = pneg %p257
        $region62: #{tpu_custom_call.1} parent=59 // pred_check_branch
          %2655 = sbr.rel (%p2653) target = $region64
        $region63: #{tpu_custom_call.1} parent=59 // pred_region
          %2657 = vsyncadd %s2649, 0
          %s2658 = smul.addr %s24, 32
          %s2659 = smul.addr %s2658, 8
          %s2660 = scalar_lea.hbm %s10, %s2659
          %s2661 = sshll.u32 %s2652, 4
          %s2662 = int_to_ptr.vmem [resolvable:$true] %s2661
          %s2663 = sshll.u32 %s2660, 4
          %s2664 = int_to_ptr.hbm [resolvable:$true] %s2663
          %2669 = dma.vmem_to_hbm [thread:$0]  %s2662, 4096, %s2664, %s2649, 128, 128, 8
        $region64: #{tpu_custom_call.1} parent=59 // pred_fallthru
          _
      $region60: #{tpu_custom_call.1} parent=5 // pred_fallthru
        _
      %p2670 = scmp.le.s32.totalorder 2, %s19
      // Predicated region
      $region65: #{tpu_custom_call.1} parent=5 // pred_check
        %p2671 = pneg %p2670
      $region66: #{tpu_custom_call.1} parent=5 // pred_check_branch
        %2673 = sbr.rel (%p2671) target = $region68
      $region67: #{tpu_custom_call.1} parent=5 // pred_region
        %s2674 = ssub.s32 %s19, 2
        // Predicated region
        $region69: #{tpu_custom_call.1} parent=67 // pred_check
          %p2675 = pneg %p263
        $region70: #{tpu_custom_call.1} parent=67 // pred_check_branch
          %2677 = sbr.rel (%p2675) target = $region72
        $region71: #{tpu_custom_call.1} parent=67 // pred_region
          %s2678 = sand.u32 %s248, 1
          %s2679 = scalar_lea.sflag [#allocation3], %s2678
          %s2680 = sand.u32 %s248, 1
          %s2681 = smul.addr %s2680, 256
          %s2682 = scalar_lea.vmem [#allocation2], %s2681
          %2684 = dma.done %s2679, 4096
        $region72: #{tpu_custom_call.1} parent=67 // pred_fallthru
          _
      $region68: #{tpu_custom_call.1} parent=5 // pred_fallthru
        _
    $region6: #{tpu_custom_call.1} parent=1 // loop_footer
      %s23 = sadd.s32 1, %s19
    $region7: #{tpu_custom_call.1} parent=1 // loop_footer_branch
      %18 = sbr.rel target = $region3
    $region8: #{tpu_custom_call.1} parent=1 // loop_exit
      _
    %2685 = vsyncpa [#allocation3], 1
    %s2686 = scalar_lea.sflag [#allocation3], 1
    %2687 = vsyncpa %s2686, 1

</llo_original>
